<compile_context>
chip_gen: v6e
topology: v6e:2x2x1
jax: 0.10.0
libtpu: 0.0.40
codegen_flags: <defaults>
</compile_context>

<pallas_src>
import jax
import jax.numpy as jnp
import numpy as np
from jax.experimental import pallas as pl
from jax.experimental.pallas import tpu as pltpu


def _sigmoid(x):
    # sigmoid(x) == 0.5*tanh(0.5*x) + 0.5 : one EUP push instead of exp+divide.
    return 0.5 * jnp.tanh(0.5 * x) + 0.5


def _make_lstm_kernel(tc, hp, w_dtype):
    """Recurrence-only kernel. gx_ref: (Tc,Bc,4Hp) precomputed input gates,
    whh_ref: (Hp,4Hp) resident weights, out_ref: (Tc,Bc,Hp), h/c scratch (Bc,Hp)."""

    def kernel(gx_ref, whh_ref, out_ref, h_sc, c_sc):
        # First time-chunk of this batch shard -> reset carries.
        @pl.when(pl.program_id(1) == 0)
        def _():
            h_sc[...] = jnp.zeros_like(h_sc)
            c_sc[...] = jnp.zeros_like(c_sc)

        def step(s, carry):
            gx = gx_ref[s]                                       # (Bc, 4Hp) f32
            h_prev = h_sc[...]
            # Only the h-dependent matmul remains on the serial path.
            gates = gx + jnp.dot(h_prev.astype(w_dtype), whh_ref[...],
                                 preferred_element_type=jnp.float32)
            # Hp is a multiple of 128 -> all gate slices are lane-tile aligned.
            i_g = _sigmoid(gates[:, 0 * hp:1 * hp])
            f_g = _sigmoid(gates[:, 1 * hp:2 * hp])
            g_g = jnp.tanh(gates[:, 2 * hp:3 * hp])
            o_g = _sigmoid(gates[:, 3 * hp:4 * hp])
            c_new = f_g * c_sc[...] + i_g * g_g
            h_new = o_g * jnp.tanh(c_new)
            c_sc[...] = c_new
            h_sc[...] = h_new
            out_ref[s] = h_new.astype(out_ref.dtype)             # lane-dense store
            return carry

        jax.lax.fori_loop(0, tc, step, 0, unroll=True)

    return kernel


def _round_up(x, m):
    return ((x + m - 1) // m) * m


def _pad_gate_blocks(w, h, hp):
    """Pad last axis from gate-blocked 4*h to 4*hp (each gate padded to hp)."""
    if hp == h:
        return w
    parts = jnp.split(w, 4, axis=-1)
    pad = [(0, 0)] * (w.ndim - 1) + [(0, hp - h)]
    return jnp.concatenate([jnp.pad(p, pad) for p in parts], axis=-1)


def txt_encoder_v2_forward(params, word_matrix, word_leg=None, *,
                           time_chunk=32, batch_chunks=2,
                           weight_dtype=jnp.float32):
    """word_matrix: (B, T, E) float32 (batch-first, like PyTorch).
    Returns hidden[0].squeeze() == (B, H) if word_leg is None,
    else the stack of lstmOut[i, word_leg[i]-1, :] (B, H)."""
    B, T, E = word_matrix.shape
    H = params["fc_w"].shape[1]
    Hp = _round_up(max(H, 128), 128)          # pad hidden to full 128-lane tiles

    # ---- Fold fc1 into the LSTM input projection and pad gate blocks to Hp. ----
    w_x = params["fc_w"] @ params["w_ih"]                          # (E, 4H)
    b_x = params["fc_b"] @ params["w_ih"] + params["b"]            # (1, 4H)
    w_x = _pad_gate_blocks(w_x, H, Hp).astype(weight_dtype)        # (E, 4Hp)
    b_x = _pad_gate_blocks(b_x, H, Hp)                             # (1, 4Hp) f32
    w_hh = _pad_gate_blocks(jnp.pad(params["w_hh"], ((0, Hp - H), (0, 0))),
                            H, Hp).astype(weight_dtype)            # (Hp, 4Hp)

    # ---- One big MXU-friendly projection over all T*B rows (outside the kernel). ----
    x2d = word_matrix.reshape(B * T, E).astype(weight_dtype)
    gates_x = (jnp.dot(x2d, w_x, preferred_element_type=jnp.float32)
               + b_x).reshape(B, T, 4 * Hp)
    gates_x = jnp.transpose(gates_x, (1, 0, 2))                    # (T, B, 4Hp) time-major

    # ---- Time chunking (+ optional batch chunking for the megacore parallel axis). ----
    Tc = min(time_chunk, T)
    T_pad = _round_up(T, Tc)
    if T_pad != T:  # padded steps produce unread garbage outputs only
        gates_x = jnp.pad(gates_x, ((0, T_pad - T), (0, 0), (0, 0)))
    if batch_chunks > 1 and B % batch_chunks == 0 and (B // batch_chunks) % 8 == 0:
        n_b = batch_chunks
    else:
        n_b = 1
    Bc = B // n_b
    n_t = T_pad // Tc

    # Explicit VMEM budget: resident weights (single copy) + double-buffered I/O blocks.
    vmem_bytes = int(w_hh.size * w_hh.dtype.itemsize
                     + 2 * Tc * Bc * 4 * Hp * 4        # gates_x blocks (f32)
                     + 2 * Tc * Bc * Hp * 4            # output blocks (f32)
                     + 4 * Bc * Hp * 4)                # h/c scratch + slack
    vmem_limit = min(96 * 1024 * 1024, max(32 * 1024 * 1024, 2 * vmem_bytes))

    lstm_out_tm = pl.pallas_call(
        _make_lstm_kernel(Tc, Hp, weight_dtype),
        out_shape=jax.ShapeDtypeStruct((T_pad, B, Hp), jnp.float32),
        grid_spec=pltpu.PrefetchScalarGridSpec(
            num_scalar_prefetch=0,
            grid=(n_b, n_t),                                       # batch ||, time serial
            in_specs=[
                pl.BlockSpec((Tc, Bc, 4 * Hp), lambda b, t: (t, b, 0)),
                # Constant weights: whole array resident in VMEM, no double-buffering.
                pl.BlockSpec(memory_space=pltpu.MemorySpace.VMEM),
            ],
            out_specs=pl.BlockSpec((Tc, Bc, Hp), lambda b, t: (t, b, 0)),
            scratch_shapes=[
                pltpu.VMEM((Bc, Hp), jnp.float32),                 # h carry
                pltpu.VMEM((Bc, Hp), jnp.float32),                 # c carry
            ],
        ),
        compiler_params=pltpu.CompilerParams(
            dimension_semantics=("parallel", "arbitrary"),
            vmem_limit_bytes=vmem_limit),
    )(gates_x, w_hh)

    if word_leg is None:
        return lstm_out_tm[T - 1, :, :H]                 # == hidden[0].squeeze()
    # Time-major gather: no (T,B,H)->(B,T,H) transpose pass over HBM.
    idx = jnp.asarray(word_leg, dtype=jnp.int32) - 1     # note: word_leg==0 wraps to T-1
    return lstm_out_tm[idx, jnp.arange(B), :H]


def _ref_forward(params, x):
    """Pure-JAX reference (unfolded, unpadded math) for correctness checking."""
    B, T, E = x.shape
    H = params["fc_w"].shape[1]
    xh = x @ params["fc_w"] + params["fc_b"]             # (B, T, H)

    def step(carry, xt):
        h, c = carry
        gates = xt @ params["w_ih"] + h @ params["w_hh"] + params["b"]
        i, f, g, o = jnp.split(gates, 4, axis=-1)
        c = jax.nn.sigmoid(f) * c + jax.nn.sigmoid(i) * jnp.tanh(g)
        h = jax.nn.sigmoid(o) * jnp.tanh(c)
        return (h, c), h

    init = (jnp.zeros((B, H), jnp.float32), jnp.zeros((B, H), jnp.float32))
    (h_n, _), outs = jax.lax.scan(step, init, jnp.transpose(xh, (1, 0, 2)))
    return h_n, jnp.transpose(outs, (1, 0, 2))


def init_params(key, embed_dim, hidden_dim):
    """Deterministic init mimicking PyTorch's uniform(-1/sqrt(fan), 1/sqrt(fan))."""
    ks = jax.random.split(key, 6)
    s_fc = 1.0 / np.sqrt(embed_dim)
    s_h = 1.0 / np.sqrt(hidden_dim)
    return {
        "fc_w": jax.random.uniform(ks[0], (embed_dim, hidden_dim), jnp.float32, -s_fc, s_fc),
        "fc_b": jax.random.uniform(ks[1], (1, hidden_dim), jnp.float32, -s_fc, s_fc),
        # stored pre-transposed: (H_in, 4H) so math is x @ W ; gate order [i, f, g, o]
        "w_ih": jax.random.uniform(ks[2], (hidden_dim, 4 * hidden_dim), jnp.float32, -s_h, s_h),
        "w_hh": jax.random.uniform(ks[3], (hidden_dim, 4 * hidden_dim), jnp.float32, -s_h, s_h),
        "b": (jax.random.uniform(ks[4], (1, 4 * hidden_dim), jnp.float32, -s_h, s_h)
              + jax.random.uniform(ks[5], (1, 4 * hidden_dim), jnp.float32, -s_h, s_h)),
    }
    # TODO(synk): seq_type='gruV2' branch (nn.GRU) not implemented; only 'lstmV2'.


if __name__ == "__main__":
    B, T, E, H = 2, 8, 32, 32

    key = jax.random.PRNGKey(0)
    k_param, k_x = jax.random.split(key)
    params = init_params(k_param, E, H)
    word_matrix = jax.random.normal(k_x, (B, T, E), dtype=jnp.float32)
    word_leg = jnp.array([T, T // 2], dtype=jnp.int32)

    # Pure-JAX reference.
    h_ref, out_seq_ref = _ref_forward(params, word_matrix)
    ref_gather = out_seq_ref[jnp.arange(B), word_leg - 1, :]

    # Path 1: wordLeg is None -> h_n.squeeze()  (f32 weights, 2 time chunks).
    h_out = jax.block_until_ready(
        txt_encoder_v2_forward(params, word_matrix, None, time_chunk=4))
    # Path 2: wordLeg given -> gather lstmOut[i, wordLeg[i]-1, :].
    gathered = jax.block_until_ready(
        txt_encoder_v2_forward(params, word_matrix, word_leg, time_chunk=4))

    # Tolerance accounts for fc1/LSTM weight folding reassociation and XLA's
    # default (non-highest) f32 matmul precision in the reference path.
    np.testing.assert_allclose(np.asarray(h_out), np.asarray(h_ref), rtol=1e-2, atol=1e-2)
    np.testing.assert_allclose(np.asarray(gathered), np.asarray(ref_gather), rtol=1e-2, atol=1e-2)

    # bf16-weight path (f32 accumulation) — looser check.
    h_bf16 = jax.block_until_ready(
        txt_encoder_v2_forward(params, word_matrix, None, time_chunk=4,
                               weight_dtype=jnp.bfloat16))
    np.testing.assert_allclose(np.asarray(h_bf16), np.asarray(h_ref), rtol=7e-2, atol=7e-2)

    assert h_out.shape == (B, H) and gathered.shape == (B, H)
    print("KERNEL_OK")
</pallas_src>

<mosaic_0001>
module attributes {stable_mosaic.version = 11 : i64} {
  func.func @kernel(%arg0: i32, %arg1: i32, %arg2: memref<4x2x512xf32, #tpu.memory_space<vmem>>, %arg3: memref<128x512xf32, #tpu.memory_space<vmem>>, %arg4: memref<4x2x128xf32, #tpu.memory_space<vmem>>, %arg5: memref<2x128xf32, #tpu.memory_space<vmem>>, %arg6: memref<2x128xf32, #tpu.memory_space<vmem>>) attributes {dimension_semantics = [#tpu.dimension_semantics<parallel>, #tpu.dimension_semantics<arbitrary>], iteration_bounds = array<i64: 1, 2>, scalar_prefetch = 0 : i64, scratch_operands = 2 : i64, tpu.core_type = #tpu.core_type<tc>, window_params = [{transform_indices = @transform_0, window_bounds = array<i64: 4, 2, 512>}, {pipeline_mode = #tpu.pipeline_mode<synchronous>, transform_indices = @transform_1, window_bounds = array<i64: 128, 512>}, {transform_indices = @transform_2, window_bounds = array<i64: 4, 2, 128>}]} {
    %c0_i32 = arith.constant 0 : i32
    %0 = arith.cmpi eq, %arg1, %c0_i32 : i32
    %1 = arith.extui %0 : i1 to i32
    %c0_i32_0 = arith.constant 0 : i32
    %2 = arith.cmpi ne, %1, %c0_i32_0 : i32
    scf.if %2 {
      %cst_96 = arith.constant 0.000000e+00 : f32
      %183 = vector.broadcast %cst_96 : f32 to vector<2x128xf32>
      %c0_97 = arith.constant 0 : index
      %c0_98 = arith.constant 0 : index
      %184 = vector.load %arg5[%c0_97, %c0_98] : memref<2x128xf32, #tpu.memory_space<vmem>>, vector<2x128xf32>
      tpu.vector_store %arg5[%c0_97, %c0_98], %183 {strides = array<i32>} : memref<2x128xf32, #tpu.memory_space<vmem>>, vector<2x128xf32>,
      %cst_99 = arith.constant 0.000000e+00 : f32
      %185 = vector.broadcast %cst_99 : f32 to vector<2x128xf32>
      %c0_100 = arith.constant 0 : index
      %c0_101 = arith.constant 0 : index
      %186 = vector.load %arg6[%c0_100, %c0_101] : memref<2x128xf32, #tpu.memory_space<vmem>>, vector<2x128xf32>
      tpu.vector_store %arg6[%c0_100, %c0_101], %185 {strides = array<i32>} : memref<2x128xf32, #tpu.memory_space<vmem>>, vector<2x128xf32>,
    } else {
    }
    %c0_i32_1 = arith.constant 0 : i32
    %3 = arith.index_cast %c0_i32_1 : i32 to index
    %c0 = arith.constant 0 : index
    %c0_2 = arith.constant 0 : index
    %4 = vector.load %arg2[%3, %c0, %c0_2] : memref<4x2x512xf32, #tpu.memory_space<vmem>>, vector<1x2x512xf32>
    %5 = vector.shape_cast %4 : vector<1x2x512xf32> to vector<2x512xf32>
    %c0_3 = arith.constant 0 : index
    %c0_4 = arith.constant 0 : index
    %6 = vector.load %arg5[%c0_3, %c0_4] : memref<2x128xf32, #tpu.memory_space<vmem>>, vector<2x128xf32>
    %c0_5 = arith.constant 0 : index
    %c0_6 = arith.constant 0 : index
    %7 = vector.load %arg3[%c0_5, %c0_6] : memref<128x512xf32, #tpu.memory_space<vmem>>, vector<128x512xf32>
    %cst = arith.constant dense<0.000000e+00> : vector<2x512xf32>
    %8 = tpu.matmul %6, %7, %cst {dimension_numbers = #tpu.dot_dimension_numbers<[1], [0], [0], [1], [0, 0, 1, 1], [], []>} : vector<2x128xf32>, vector<128x512xf32>, vector<2x512xf32> -> vector<2x512xf32>
    %9 = arith.addf %5, %8 : vector<2x512xf32>
    %10 = vector.extract_strided_slice %9 {offsets = [0, 0], sizes = [2, 128], strides = [1, 1]} : vector<2x512xf32> to vector<2x128xf32>
    %cst_7 = arith.constant 5.000000e-01 : f32
    %11 = vector.broadcast %cst_7 : f32 to vector<2x128xf32>
    %12 = arith.mulf %11, %10 : vector<2x128xf32>
    %13 = math.tanh %12 : vector<2x128xf32>
    %cst_8 = arith.constant 5.000000e-01 : f32
    %14 = vector.broadcast %cst_8 : f32 to vector<2x128xf32>
    %15 = arith.mulf %14, %13 : vector<2x128xf32>
    %cst_9 = arith.constant 5.000000e-01 : f32
    %16 = vector.broadcast %cst_9 : f32 to vector<2x128xf32>
    %17 = arith.addf %15, %16 : vector<2x128xf32>
    %18 = vector.extract_strided_slice %9 {offsets = [0, 128], sizes = [2, 128], strides = [1, 1]} : vector<2x512xf32> to vector<2x128xf32>
    %cst_10 = arith.constant 5.000000e-01 : f32
    %19 = vector.broadcast %cst_10 : f32 to vector<2x128xf32>
    %20 = arith.mulf %19, %18 : vector<2x128xf32>
    %21 = math.tanh %20 : vector<2x128xf32>
    %cst_11 = arith.constant 5.000000e-01 : f32
    %22 = vector.broadcast %cst_11 : f32 to vector<2x128xf32>
    %23 = arith.mulf %22, %21 : vector<2x128xf32>
    %cst_12 = arith.constant 5.000000e-01 : f32
    %24 = vector.broadcast %cst_12 : f32 to vector<2x128xf32>
    %25 = arith.addf %23, %24 : vector<2x128xf32>
    %26 = vector.extract_strided_slice %9 {offsets = [0, 256], sizes = [2, 128], strides = [1, 1]} : vector<2x512xf32> to vector<2x128xf32>
    %27 = math.tanh %26 : vector<2x128xf32>
    %28 = vector.extract_strided_slice %9 {offsets = [0, 384], sizes = [2, 128], strides = [1, 1]} : vector<2x512xf32> to vector<2x128xf32>
    %cst_13 = arith.constant 5.000000e-01 : f32
    %29 = vector.broadcast %cst_13 : f32 to vector<2x128xf32>
    %30 = arith.mulf %29, %28 : vector<2x128xf32>
    %31 = math.tanh %30 : vector<2x128xf32>
    %cst_14 = arith.constant 5.000000e-01 : f32
    %32 = vector.broadcast %cst_14 : f32 to vector<2x128xf32>
    %33 = arith.mulf %32, %31 : vector<2x128xf32>
    %cst_15 = arith.constant 5.000000e-01 : f32
    %34 = vector.broadcast %cst_15 : f32 to vector<2x128xf32>
    %35 = arith.addf %33, %34 : vector<2x128xf32>
    %c0_16 = arith.constant 0 : index
    %c0_17 = arith.constant 0 : index
    %36 = vector.load %arg6[%c0_16, %c0_17] : memref<2x128xf32, #tpu.memory_space<vmem>>, vector<2x128xf32>
    %37 = arith.mulf %25, %36 : vector<2x128xf32>
    %38 = arith.mulf %17, %27 : vector<2x128xf32>
    %39 = arith.addf %37, %38 : vector<2x128xf32>
    %40 = math.tanh %39 : vector<2x128xf32>
    %41 = arith.mulf %35, %40 : vector<2x128xf32>
    %c0_18 = arith.constant 0 : index
    %c0_19 = arith.constant 0 : index
    %42 = vector.load %arg6[%c0_18, %c0_19] : memref<2x128xf32, #tpu.memory_space<vmem>>, vector<2x128xf32>
    tpu.vector_store %arg6[%c0_18, %c0_19], %39 {strides = array<i32>} : memref<2x128xf32, #tpu.memory_space<vmem>>, vector<2x128xf32>,
    %c0_20 = arith.constant 0 : index
    %c0_21 = arith.constant 0 : index
    %43 = vector.load %arg5[%c0_20, %c0_21] : memref<2x128xf32, #tpu.memory_space<vmem>>, vector<2x128xf32>
    tpu.vector_store %arg5[%c0_20, %c0_21], %41 {strides = array<i32>} : memref<2x128xf32, #tpu.memory_space<vmem>>, vector<2x128xf32>,
    %44 = arith.index_cast %c0_i32_1 : i32 to index
    %c0_22 = arith.constant 0 : index
    %c0_23 = arith.constant 0 : index
    %45 = vector.load %arg4[%44, %c0_22, %c0_23] : memref<4x2x128xf32, #tpu.memory_space<vmem>>, vector<1x2x128xf32>
    %46 = vector.shape_cast %45 : vector<1x2x128xf32> to vector<2x128xf32>
    %47 = vector.shape_cast %41 : vector<2x128xf32> to vector<1x2x128xf32>
    tpu.vector_store %arg4[%44, %c0_22, %c0_23], %47 {strides = array<i32>} : memref<4x2x128xf32, #tpu.memory_space<vmem>>, vector<1x2x128xf32>,
    %c1_i32 = arith.constant 1 : i32
    %48 = arith.index_cast %c1_i32 : i32 to index
    %c0_24 = arith.constant 0 : index
    %c0_25 = arith.constant 0 : index
    %49 = vector.load %arg2[%48, %c0_24, %c0_25] : memref<4x2x512xf32, #tpu.memory_space<vmem>>, vector<1x2x512xf32>
    %50 = vector.shape_cast %49 : vector<1x2x512xf32> to vector<2x512xf32>
    %c0_26 = arith.constant 0 : index
    %c0_27 = arith.constant 0 : index
    %51 = vector.load %arg5[%c0_26, %c0_27] : memref<2x128xf32, #tpu.memory_space<vmem>>, vector<2x128xf32>
    %c0_28 = arith.constant 0 : index
    %c0_29 = arith.constant 0 : index
    %52 = vector.load %arg3[%c0_28, %c0_29] : memref<128x512xf32, #tpu.memory_space<vmem>>, vector<128x512xf32>
    %cst_30 = arith.constant dense<0.000000e+00> : vector<2x512xf32>
    %53 = tpu.matmul %51, %52, %cst_30 {dimension_numbers = #tpu.dot_dimension_numbers<[1], [0], [0], [1], [0, 0, 1, 1], [], []>} : vector<2x128xf32>, vector<128x512xf32>, vector<2x512xf32> -> vector<2x512xf32>
    %54 = arith.addf %50, %53 : vector<2x512xf32>
    %55 = vector.extract_strided_slice %54 {offsets = [0, 0], sizes = [2, 128], strides = [1, 1]} : vector<2x512xf32> to vector<2x128xf32>
    %cst_31 = arith.constant 5.000000e-01 : f32
    %56 = vector.broadcast %cst_31 : f32 to vector<2x128xf32>
    %57 = arith.mulf %56, %55 : vector<2x128xf32>
    %58 = math.tanh %57 : vector<2x128xf32>
    %cst_32 = arith.constant 5.000000e-01 : f32
    %59 = vector.broadcast %cst_32 : f32 to vector<2x128xf32>
    %60 = arith.mulf %59, %58 : vector<2x128xf32>
    %cst_33 = arith.constant 5.000000e-01 : f32
    %61 = vector.broadcast %cst_33 : f32 to vector<2x128xf32>
    %62 = arith.addf %60, %61 : vector<2x128xf32>
    %63 = vector.extract_strided_slice %54 {offsets = [0, 128], sizes = [2, 128], strides = [1, 1]} : vector<2x512xf32> to vector<2x128xf32>
    %cst_34 = arith.constant 5.000000e-01 : f32
    %64 = vector.broadcast %cst_34 : f32 to vector<2x128xf32>
    %65 = arith.mulf %64, %63 : vector<2x128xf32>
    %66 = math.tanh %65 : vector<2x128xf32>
    %cst_35 = arith.constant 5.000000e-01 : f32
    %67 = vector.broadcast %cst_35 : f32 to vector<2x128xf32>
    %68 = arith.mulf %67, %66 : vector<2x128xf32>
    %cst_36 = arith.constant 5.000000e-01 : f32
    %69 = vector.broadcast %cst_36 : f32 to vector<2x128xf32>
    %70 = arith.addf %68, %69 : vector<2x128xf32>
    %71 = vector.extract_strided_slice %54 {offsets = [0, 256], sizes = [2, 128], strides = [1, 1]} : vector<2x512xf32> to vector<2x128xf32>
    %72 = math.tanh %71 : vector<2x128xf32>
    %73 = vector.extract_strided_slice %54 {offsets = [0, 384], sizes = [2, 128], strides = [1, 1]} : vector<2x512xf32> to vector<2x128xf32>
    %cst_37 = arith.constant 5.000000e-01 : f32
    %74 = vector.broadcast %cst_37 : f32 to vector<2x128xf32>
    %75 = arith.mulf %74, %73 : vector<2x128xf32>
    %76 = math.tanh %75 : vector<2x128xf32>
    %cst_38 = arith.constant 5.000000e-01 : f32
    %77 = vector.broadcast %cst_38 : f32 to vector<2x128xf32>
    %78 = arith.mulf %77, %76 : vector<2x128xf32>
    %cst_39 = arith.constant 5.000000e-01 : f32
    %79 = vector.broadcast %cst_39 : f32 to vector<2x128xf32>
    %80 = arith.addf %78, %79 : vector<2x128xf32>
    %c0_40 = arith.constant 0 : index
    %c0_41 = arith.constant 0 : index
    %81 = vector.load %arg6[%c0_40, %c0_41] : memref<2x128xf32, #tpu.memory_space<vmem>>, vector<2x128xf32>
    %82 = arith.mulf %70, %81 : vector<2x128xf32>
    %83 = arith.mulf %62, %72 : vector<2x128xf32>
    %84 = arith.addf %82, %83 : vector<2x128xf32>
    %85 = math.tanh %84 : vector<2x128xf32>
    %86 = arith.mulf %80, %85 : vector<2x128xf32>
    %c0_42 = arith.constant 0 : index
    %c0_43 = arith.constant 0 : index
    %87 = vector.load %arg6[%c0_42, %c0_43] : memref<2x128xf32, #tpu.memory_space<vmem>>, vector<2x128xf32>
    tpu.vector_store %arg6[%c0_42, %c0_43], %84 {strides = array<i32>} : memref<2x128xf32, #tpu.memory_space<vmem>>, vector<2x128xf32>,
    %c0_44 = arith.constant 0 : index
    %c0_45 = arith.constant 0 : index
    %88 = vector.load %arg5[%c0_44, %c0_45] : memref<2x128xf32, #tpu.memory_space<vmem>>, vector<2x128xf32>
    tpu.vector_store %arg5[%c0_44, %c0_45], %86 {strides = array<i32>} : memref<2x128xf32, #tpu.memory_space<vmem>>, vector<2x128xf32>,
    %89 = arith.index_cast %c1_i32 : i32 to index
    %c0_46 = arith.constant 0 : index
    %c0_47 = arith.constant 0 : index
    %90 = vector.load %arg4[%89, %c0_46, %c0_47] : memref<4x2x128xf32, #tpu.memory_space<vmem>>, vector<1x2x128xf32>
    %91 = vector.shape_cast %90 : vector<1x2x128xf32> to vector<2x128xf32>
    %92 = vector.shape_cast %86 : vector<2x128xf32> to vector<1x2x128xf32>
    tpu.vector_store %arg4[%89, %c0_46, %c0_47], %92 {strides = array<i32>} : memref<4x2x128xf32, #tpu.memory_space<vmem>>, vector<1x2x128xf32>,
    %c2_i32 = arith.constant 2 : i32
    %93 = arith.index_cast %c2_i32 : i32 to index
    %c0_48 = arith.constant 0 : index
    %c0_49 = arith.constant 0 : index
    %94 = vector.load %arg2[%93, %c0_48, %c0_49] : memref<4x2x512xf32, #tpu.memory_space<vmem>>, vector<1x2x512xf32>
    %95 = vector.shape_cast %94 : vector<1x2x512xf32> to vector<2x512xf32>
    %c0_50 = arith.constant 0 : index
    %c0_51 = arith.constant 0 : index
    %96 = vector.load %arg5[%c0_50, %c0_51] : memref<2x128xf32, #tpu.memory_space<vmem>>, vector<2x128xf32>
    %c0_52 = arith.constant 0 : index
    %c0_53 = arith.constant 0 : index
    %97 = vector.load %arg3[%c0_52, %c0_53] : memref<128x512xf32, #tpu.memory_space<vmem>>, vector<128x512xf32>
    %cst_54 = arith.constant dense<0.000000e+00> : vector<2x512xf32>
    %98 = tpu.matmul %96, %97, %cst_54 {dimension_numbers = #tpu.dot_dimension_numbers<[1], [0], [0], [1], [0, 0, 1, 1], [], []>} : vector<2x128xf32>, vector<128x512xf32>, vector<2x512xf32> -> vector<2x512xf32>
    %99 = arith.addf %95, %98 : vector<2x512xf32>
    %100 = vector.extract_strided_slice %99 {offsets = [0, 0], sizes = [2, 128], strides = [1, 1]} : vector<2x512xf32> to vector<2x128xf32>
    %cst_55 = arith.constant 5.000000e-01 : f32
    %101 = vector.broadcast %cst_55 : f32 to vector<2x128xf32>
    %102 = arith.mulf %101, %100 : vector<2x128xf32>
    %103 = math.tanh %102 : vector<2x128xf32>
    %cst_56 = arith.constant 5.000000e-01 : f32
    %104 = vector.broadcast %cst_56 : f32 to vector<2x128xf32>
    %105 = arith.mulf %104, %103 : vector<2x128xf32>
    %cst_57 = arith.constant 5.000000e-01 : f32
    %106 = vector.broadcast %cst_57 : f32 to vector<2x128xf32>
    %107 = arith.addf %105, %106 : vector<2x128xf32>
    %108 = vector.extract_strided_slice %99 {offsets = [0, 128], sizes = [2, 128], strides = [1, 1]} : vector<2x512xf32> to vector<2x128xf32>
    %cst_58 = arith.constant 5.000000e-01 : f32
    %109 = vector.broadcast %cst_58 : f32 to vector<2x128xf32>
    %110 = arith.mulf %109, %108 : vector<2x128xf32>
    %111 = math.tanh %110 : vector<2x128xf32>
    %cst_59 = arith.constant 5.000000e-01 : f32
    %112 = vector.broadcast %cst_59 : f32 to vector<2x128xf32>
    %113 = arith.mulf %112, %111 : vector<2x128xf32>
    %cst_60 = arith.constant 5.000000e-01 : f32
    %114 = vector.broadcast %cst_60 : f32 to vector<2x128xf32>
    %115 = arith.addf %113, %114 : vector<2x128xf32>
    %116 = vector.extract_strided_slice %99 {offsets = [0, 256], sizes = [2, 128], strides = [1, 1]} : vector<2x512xf32> to vector<2x128xf32>
    %117 = math.tanh %116 : vector<2x128xf32>
    %118 = vector.extract_strided_slice %99 {offsets = [0, 384], sizes = [2, 128], strides = [1, 1]} : vector<2x512xf32> to vector<2x128xf32>
    %cst_61 = arith.constant 5.000000e-01 : f32
    %119 = vector.broadcast %cst_61 : f32 to vector<2x128xf32>
    %120 = arith.mulf %119, %118 : vector<2x128xf32>
    %121 = math.tanh %120 : vector<2x128xf32>
    %cst_62 = arith.constant 5.000000e-01 : f32
    %122 = vector.broadcast %cst_62 : f32 to vector<2x128xf32>
    %123 = arith.mulf %122, %121 : vector<2x128xf32>
    %cst_63 = arith.constant 5.000000e-01 : f32
    %124 = vector.broadcast %cst_63 : f32 to vector<2x128xf32>
    %125 = arith.addf %123, %124 : vector<2x128xf32>
    %c0_64 = arith.constant 0 : index
    %c0_65 = arith.constant 0 : index
    %126 = vector.load %arg6[%c0_64, %c0_65] : memref<2x128xf32, #tpu.memory_space<vmem>>, vector<2x128xf32>
    %127 = arith.mulf %115, %126 : vector<2x128xf32>
    %128 = arith.mulf %107, %117 : vector<2x128xf32>
    %129 = arith.addf %127, %128 : vector<2x128xf32>
    %130 = math.tanh %129 : vector<2x128xf32>
    %131 = arith.mulf %125, %130 : vector<2x128xf32>
    %c0_66 = arith.constant 0 : index
    %c0_67 = arith.constant 0 : index
    %132 = vector.load %arg6[%c0_66, %c0_67] : memref<2x128xf32, #tpu.memory_space<vmem>>, vector<2x128xf32>
    tpu.vector_store %arg6[%c0_66, %c0_67], %129 {strides = array<i32>} : memref<2x128xf32, #tpu.memory_space<vmem>>, vector<2x128xf32>,
    %c0_68 = arith.constant 0 : index
    %c0_69 = arith.constant 0 : index
    %133 = vector.load %arg5[%c0_68, %c0_69] : memref<2x128xf32, #tpu.memory_space<vmem>>, vector<2x128xf32>
    tpu.vector_store %arg5[%c0_68, %c0_69], %131 {strides = array<i32>} : memref<2x128xf32, #tpu.memory_space<vmem>>, vector<2x128xf32>,
    %134 = arith.index_cast %c2_i32 : i32 to index
    %c0_70 = arith.constant 0 : index
    %c0_71 = arith.constant 0 : index
    %135 = vector.load %arg4[%134, %c0_70, %c0_71] : memref<4x2x128xf32, #tpu.memory_space<vmem>>, vector<1x2x128xf32>
    %136 = vector.shape_cast %135 : vector<1x2x128xf32> to vector<2x128xf32>
    %137 = vector.shape_cast %131 : vector<2x128xf32> to vector<1x2x128xf32>
    tpu.vector_store %arg4[%134, %c0_70, %c0_71], %137 {strides = array<i32>} : memref<4x2x128xf32, #tpu.memory_space<vmem>>, vector<1x2x128xf32>,
    %c3_i32 = arith.constant 3 : i32
    %138 = arith.index_cast %c3_i32 : i32 to index
    %c0_72 = arith.constant 0 : index
    %c0_73 = arith.constant 0 : index
    %139 = vector.load %arg2[%138, %c0_72, %c0_73] : memref<4x2x512xf32, #tpu.memory_space<vmem>>, vector<1x2x512xf32>
    %140 = vector.shape_cast %139 : vector<1x2x512xf32> to vector<2x512xf32>
    %c0_74 = arith.constant 0 : index
    %c0_75 = arith.constant 0 : index
    %141 = vector.load %arg5[%c0_74, %c0_75] : memref<2x128xf32, #tpu.memory_space<vmem>>, vector<2x128xf32>
    %c0_76 = arith.constant 0 : index
    %c0_77 = arith.constant 0 : index
    %142 = vector.load %arg3[%c0_76, %c0_77] : memref<128x512xf32, #tpu.memory_space<vmem>>, vector<128x512xf32>
    %cst_78 = arith.constant dense<0.000000e+00> : vector<2x512xf32>
    %143 = tpu.matmul %141, %142, %cst_78 {dimension_numbers = #tpu.dot_dimension_numbers<[1], [0], [0], [1], [0, 0, 1, 1], [], []>} : vector<2x128xf32>, vector<128x512xf32>, vector<2x512xf32> -> vector<2x512xf32>
    %144 = arith.addf %140, %143 : vector<2x512xf32>
    %145 = vector.extract_strided_slice %144 {offsets = [0, 0], sizes = [2, 128], strides = [1, 1]} : vector<2x512xf32> to vector<2x128xf32>
    %cst_79 = arith.constant 5.000000e-01 : f32
    %146 = vector.broadcast %cst_79 : f32 to vector<2x128xf32>
    %147 = arith.mulf %146, %145 : vector<2x128xf32>
    %148 = math.tanh %147 : vector<2x128xf32>
    %cst_80 = arith.constant 5.000000e-01 : f32
    %149 = vector.broadcast %cst_80 : f32 to vector<2x128xf32>
    %150 = arith.mulf %149, %148 : vector<2x128xf32>
    %cst_81 = arith.constant 5.000000e-01 : f32
    %151 = vector.broadcast %cst_81 : f32 to vector<2x128xf32>
    %152 = arith.addf %150, %151 : vector<2x128xf32>
    %153 = vector.extract_strided_slice %144 {offsets = [0, 128], sizes = [2, 128], strides = [1, 1]} : vector<2x512xf32> to vector<2x128xf32>
    %cst_82 = arith.constant 5.000000e-01 : f32
    %154 = vector.broadcast %cst_82 : f32 to vector<2x128xf32>
    %155 = arith.mulf %154, %153 : vector<2x128xf32>
    %156 = math.tanh %155 : vector<2x128xf32>
    %cst_83 = arith.constant 5.000000e-01 : f32
    %157 = vector.broadcast %cst_83 : f32 to vector<2x128xf32>
    %158 = arith.mulf %157, %156 : vector<2x128xf32>
    %cst_84 = arith.constant 5.000000e-01 : f32
    %159 = vector.broadcast %cst_84 : f32 to vector<2x128xf32>
    %160 = arith.addf %158, %159 : vector<2x128xf32>
    %161 = vector.extract_strided_slice %144 {offsets = [0, 256], sizes = [2, 128], strides = [1, 1]} : vector<2x512xf32> to vector<2x128xf32>
    %162 = math.tanh %161 : vector<2x128xf32>
    %163 = vector.extract_strided_slice %144 {offsets = [0, 384], sizes = [2, 128], strides = [1, 1]} : vector<2x512xf32> to vector<2x128xf32>
    %cst_85 = arith.constant 5.000000e-01 : f32
    %164 = vector.broadcast %cst_85 : f32 to vector<2x128xf32>
    %165 = arith.mulf %164, %163 : vector<2x128xf32>
    %166 = math.tanh %165 : vector<2x128xf32>
    %cst_86 = arith.constant 5.000000e-01 : f32
    %167 = vector.broadcast %cst_86 : f32 to vector<2x128xf32>
    %168 = arith.mulf %167, %166 : vector<2x128xf32>
    %cst_87 = arith.constant 5.000000e-01 : f32
    %169 = vector.broadcast %cst_87 : f32 to vector<2x128xf32>
    %170 = arith.addf %168, %169 : vector<2x128xf32>
    %c0_88 = arith.constant 0 : index
    %c0_89 = arith.constant 0 : index
    %171 = vector.load %arg6[%c0_88, %c0_89] : memref<2x128xf32, #tpu.memory_space<vmem>>, vector<2x128xf32>
    %172 = arith.mulf %160, %171 : vector<2x128xf32>
    %173 = arith.mulf %152, %162 : vector<2x128xf32>
    %174 = arith.addf %172, %173 : vector<2x128xf32>
    %175 = math.tanh %174 : vector<2x128xf32>
    %176 = arith.mulf %170, %175 : vector<2x128xf32>
    %c0_90 = arith.constant 0 : index
    %c0_91 = arith.constant 0 : index
    %177 = vector.load %arg6[%c0_90, %c0_91] : memref<2x128xf32, #tpu.memory_space<vmem>>, vector<2x128xf32>
    tpu.vector_store %arg6[%c0_90, %c0_91], %174 {strides = array<i32>} : memref<2x128xf32, #tpu.memory_space<vmem>>, vector<2x128xf32>,
    %c0_92 = arith.constant 0 : index
    %c0_93 = arith.constant 0 : index
    %178 = vector.load %arg5[%c0_92, %c0_93] : memref<2x128xf32, #tpu.memory_space<vmem>>, vector<2x128xf32>
    tpu.vector_store %arg5[%c0_92, %c0_93], %176 {strides = array<i32>} : memref<2x128xf32, #tpu.memory_space<vmem>>, vector<2x128xf32>,
    %179 = arith.index_cast %c3_i32 : i32 to index
    %c0_94 = arith.constant 0 : index
    %c0_95 = arith.constant 0 : index
    %180 = vector.load %arg4[%179, %c0_94, %c0_95] : memref<4x2x128xf32, #tpu.memory_space<vmem>>, vector<1x2x128xf32>
    %181 = vector.shape_cast %180 : vector<1x2x128xf32> to vector<2x128xf32>
    %182 = vector.shape_cast %176 : vector<2x128xf32> to vector<1x2x128xf32>
    tpu.vector_store %arg4[%179, %c0_94, %c0_95], %182 {strides = array<i32>} : memref<4x2x128xf32, #tpu.memory_space<vmem>>, vector<1x2x128xf32>,
    %c4_i32 = arith.constant 4 : i32
    return
  }
  func.func @transform_0(%arg0: i32, %arg1: i32) -> (i32, i32, i32) {
    %c0_i32 = arith.constant 0 : i32
    %c0_i32_0 = arith.constant 0 : i32
    return %arg1, %arg0, %c0_i32 : i32, i32, i32
  }
  func.func @transform_1(%arg0: i32, %arg1: i32) -> (i32, i32) {
    %c0_i32 = arith.constant 0 : i32
    %c0_i32_0 = arith.constant 0 : i32
    %c0_i32_1 = arith.constant 0 : i32
    return %c0_i32, %c0_i32_0 : i32, i32
  }
  func.func @transform_2(%arg0: i32, %arg1: i32) -> (i32, i32, i32) {
    %c0_i32 = arith.constant 0 : i32
    %c0_i32_0 = arith.constant 0 : i32
    return %arg1, %arg0, %c0_i32 : i32, i32, i32
  }
}

</mosaic_0001>

<llo_original>
// kernel: tpu_custom_call.1
$region0: #{tpu_custom_call.1}
  #allocation0 [shape = 'u32[]', space=smem, size = 0x4, offset = 0x4, fixed_abs, tag = 'smem constant byte address 0x4 - core index']
  #allocation1 [shape = 'u32[144,128]{1,0:T(1,128)}', space=vmem, size = 0x12000, scoped, tag = 'internal scratch']
  #allocation2 [shape = 'f32[2,128]{1,0:T(2,128)}', space=vmem, size = 0x400, scoped, tag = 'scratch operand']
  #allocation3 [shape = 'f32[2,128]{1,0:T(2,128)}', space=vmem, size = 0x400, scoped, tag = 'scratch operand']
  %s0 = inlined_call_operand.hbm [shape: f32[8,2,512], index: 0, kind: input, shape index: {}]
  %s1 = inlined_call_operand.hbm [shape: f32[128,512], index: 1, kind: input, shape index: {}]
  %s2 = inlined_call_operand.hbm [shape: f32[8,2,128], index: 2, kind: output, shape index: {}]
  %s3 = sld [smem:[#allocation0]]
  $region53: #{tpu_custom_call.1} parent=0
    _
  %s5 = ssub.s32 1, %s3
  %s6 = scalar_select 0, %s5, %s3
  $region1: #{tpu_custom_call.1} parent=0
    #allocation4 [shape = 'u8[32768]{0}', space=vmem, size = 0x8000, scoped, tag = 'input window, operand 0']
    #allocation5 [shape = 's32[2]{0}', space=sflag, size = 0x8, scoped, tag = 'scoped memory for tpu_custom_call.1']
    #allocation6 [shape = 's32[2]{0}', space=sflag, size = 0x8, scoped, tag = 'scoped memory for tpu_custom_call.1']
    #allocation7 [shape = 'u8[262144]{0}', space=vmem, size = 0x40000, scoped, tag = 'input window, operand 1, single buffered']
    #allocation8 [shape = 's32[1]{0}', space=sflag, size = 0x4, scoped, tag = 'scoped memory for tpu_custom_call.1']
    #allocation9 [shape = 'u8[8192]{0}', space=vmem, size = 0x2000, scoped, tag = 'output window, operand 0']
    %7 = vsyncpa [#allocation5], 0
    %s8 = scalar_lea.sflag [#allocation5], 1
    %9 = vsyncpa %s8, 0
    %10 = vsyncpa [#allocation8], 0
    %11 = vsyncpa [#allocation6], 0
    %s12 = scalar_lea.sflag [#allocation6], 1
    %13 = vsyncpa %s12, 0
    loop: start=0, step=1, limit=4
    $region2: #{tpu_custom_call.1} parent=1 // loop_pre_header
      _
    $region3: #{tpu_custom_call.1} parent=1 // loop_header
      %s15 = sphi 0, %s19
      %p16 = scmp.ge.s32.totalorder %s15, 4
      %s22 = sphi 0, %s34
      %s23 = sphi 0, %s30
      %s24 = sphi 0, %s22
      %s25 = sphi 0, %s23
      %s26 = sphi 0, %s24
      %s27 = sphi 0, %s25
      %s39 = sphi 0, %s41
      %s42 = sphi 0, %s39
      %s43 = sphi 0, %s42
      %s59 = sphi 0, %s43
      %s63 = sphi 0, %s63
      %s65 = sphi 0, %s63
      %s66 = sphi 0, %s65
      %s80 = sphi 0, %s66
      %s88 = sphi 0, %s90
      %s91 = sphi 0, %s88
      %s92 = sphi 0, %s91
      %s108 = sphi 0, %s92
    $region4: #{tpu_custom_call.1} parent=1 // loop_header_branch
      %18 = sbr.rel (%p16) target = $region8
    $region5: #{tpu_custom_call.1} parent=1 // loop_body
      %s20 = ssub.s32 %s15, 1
      %s21 = ssub.s32 %s15, 2
      %s28 = sadd.s32 1, %s23
      %p29 = scmp.ge.s32.totalorder %s28, 2
      %s30 = scalar_select %p29, 0, %s28
      %s31 = sadd.s32 1, %s22
      %s32 = scalar_select %p29, %s31, %s22
      %p33 = scmp.ge.s32.totalorder %s32, 1
      %s34 = scalar_select %p33, 0, %s32
      %s35 = ssub.s32 %s23, %s30
      %s36 = ssub.s32 %s22, %s34
      %s37 = sor.u32 %s35, %s36
      %p38 = scmp.eq.s32.totalorder %s37, 0
      %s40 = sadd.s32 %s39, 1
      %s41 = scalar_select %p38, %s39, %s40
      %p44 = pneg %p38
      %p45 = scmp.eq.s32.totalorder %s15, 1
      %p46 = por %p44, %p45
      %p47 = scmp.ne.s32.totalorder %s39, %s42
      %p48 = scmp.eq.s32.totalorder %s15, 0
      %p49 = por %p47, %p48
      %p50 = scmp.ne.s32.totalorder %s39, %s42
      %p51 = scmp.eq.s32.totalorder %s20, 1
      %p52 = por %p50, %p51
      %p53 = scmp.ne.s32.totalorder %s42, %s43
      %p54 = scmp.eq.s32.totalorder %s20, 0
      %p55 = por %p53, %p54
      %p56 = scmp.ne.s32.totalorder %s42, %s43
      %p57 = scmp.eq.s32.totalorder %s21, 1
      %p58 = por %p56, %p57
      %p60 = scmp.ne.s32.totalorder %s43, %s59
      %p61 = scmp.eq.s32.totalorder %s21, 0
      %p62 = por %p60, %p61
      %s64 = sadd.s32 %s63, 1
      %p67 = scmp.eq.s32.totalorder %s15, 1
      %p68 = scmp.ne.s32.totalorder %s63, %s65
      %p69 = scmp.eq.s32.totalorder %s15, 0
      %p70 = por %p68, %p69
      %p71 = scmp.ne.s32.totalorder %s63, %s65
      %p72 = scmp.eq.s32.totalorder %s20, 1
      %p73 = por %p71, %p72
      %p74 = scmp.ne.s32.totalorder %s65, %s66
      %p75 = scmp.eq.s32.totalorder %s20, 0
      %p76 = por %p74, %p75
      %p77 = scmp.ne.s32.totalorder %s65, %s66
      %p78 = scmp.eq.s32.totalorder %s21, 1
      %p79 = por %p77, %p78
      %p81 = scmp.ne.s32.totalorder %s66, %s80
      %p82 = scmp.eq.s32.totalorder %s21, 0
      %p83 = por %p81, %p82
      %s84 = ssub.s32 %s23, %s30
      %s85 = ssub.s32 %s22, %s34
      %s86 = sor.u32 %s84, %s85
      %p87 = scmp.eq.s32.totalorder %s86, 0
      %s89 = sadd.s32 %s88, 1
      %s90 = scalar_select %p87, %s88, %s89
      %p93 = pneg %p87
      %p94 = scmp.eq.s32.totalorder %s15, 1
      %p95 = por %p93, %p94
      %p96 = scmp.ne.s32.totalorder %s88, %s91
      %p97 = scmp.eq.s32.totalorder %s15, 0
      %p98 = por %p96, %p97
      %p99 = scmp.ne.s32.totalorder %s88, %s91
      %p100 = scmp.eq.s32.totalorder %s20, 1
      %p101 = por %p99, %p100
      %p102 = scmp.ne.s32.totalorder %s91, %s92
      %p103 = scmp.eq.s32.totalorder %s20, 0
      %p104 = por %p102, %p103
      %p105 = scmp.ne.s32.totalorder %s91, %s92
      %p106 = scmp.eq.s32.totalorder %s21, 1
      %p107 = por %p105, %p106
      %p109 = scmp.ne.s32.totalorder %s92, %s108
      %p110 = scmp.eq.s32.totalorder %s21, 0
      %p111 = por %p109, %p110
      %p112 = scmp.le.s32.totalorder 1, %s15
      %p113 = scmp.lt.s32.totalorder %s15, 3
      %p114 = pnand %p112, %p113
      %p115 = pneg %p114
      // Predicated region
      $region9: #{tpu_custom_call.1} parent=5 // pred_check
        _
      $region10: #{tpu_custom_call.1} parent=5 // pred_check_branch
        %117 = sbr.rel (%p114) target = $region12
      $region11: #{tpu_custom_call.1} parent=5 // pred_region
        %s118 = ssub.s32 %s15, 1
        // Predicated region
        $region13: #{tpu_custom_call.1} parent=11 // pred_check
          %p119 = pneg %p76
        $region14: #{tpu_custom_call.1} parent=11 // pred_check_branch
          %121 = sbr.rel (%p119) target = $region16
        $region15: #{tpu_custom_call.1} parent=11 // pred_region
          %s123 = ssub.s32 8192, 8192
          %124 = vsyncadd [#allocation8], %s123
          %s125 = sshll.u32 [#allocation7], 4
          %s126 = int_to_ptr.vmem [resolvable:$true] %s125
          %131 = dma.hbm_to_vmem [thread:$0]  %s1, 8192, %s126, [#allocation8], 512, 512, 32
        $region16: #{tpu_custom_call.1} parent=11 // pred_fallthru
          _
      $region12: #{tpu_custom_call.1} parent=5 // pred_fallthru
        _
      %p132 = scmp.lt.s32.totalorder %s15, 2
      // Predicated region
      $region17: #{tpu_custom_call.1} parent=5 // pred_check
        %p133 = pneg %p132
      $region18: #{tpu_custom_call.1} parent=5 // pred_check_branch
        %135 = sbr.rel (%p133) target = $region20
      $region19: #{tpu_custom_call.1} parent=5 // pred_region
        // Predicated region
        $region21: #{tpu_custom_call.1} parent=19 // pred_check
          %p136 = pneg %p49
        $region22: #{tpu_custom_call.1} parent=19 // pred_check_branch
          %138 = sbr.rel (%p136) target = $region24
        $region23: #{tpu_custom_call.1} parent=19 // pred_region
          %s139 = sand.u32 %s39, 1
          %s140 = scalar_lea.sflag [#allocation5], %s139
          %s141 = sand.u32 %s39, 1
          %s142 = smul.addr %s141, 32
          %s143 = scalar_lea.vmem [#allocation4], %s142
          %s144 = smul.u32 4, %s23
          %s146 = ssub.s32 512, 512
          %147 = vsyncadd %s140, %s146
          %s148 = smul.addr %s22, 4
          %s149 = smul.addr %s144, 4
          %s150 = sadd.s32 %s148, %s149
          %s151 = smul.addr %s150, 32
          %s152 = scalar_lea.hbm %s0, %s151
          %s153 = sshll.u32 %s143, 4
          %s154 = int_to_ptr.vmem [resolvable:$true] %s153
          %159 = dma.hbm_to_vmem [thread:$0]  %s152, 512, %s154, %s140, 128, 128, 8
        $region24: #{tpu_custom_call.1} parent=19 // pred_fallthru
          _
      $region20: #{tpu_custom_call.1} parent=5 // pred_fallthru
        _
      %p160 = scmp.le.s32.totalorder 1, %s15
      %p161 = scmp.lt.s32.totalorder %s15, 3
      %p162 = pnand %p160, %p161
      %p163 = pneg %p162
      // Predicated region
      $region25: #{tpu_custom_call.1} parent=5 // pred_check
        _
      $region26: #{tpu_custom_call.1} parent=5 // pred_check_branch
        %165 = sbr.rel (%p162) target = $region28
      $region27: #{tpu_custom_call.1} parent=5 // pred_region
        %s166 = ssub.s32 %s15, 1
        %s167 = sand.u32 %s42, 1
        %s168 = scalar_lea.sflag [#allocation5], %s167
        %s169 = sand.u32 %s42, 1
        %s170 = smul.addr %s169, 32
        %s171 = scalar_lea.vmem [#allocation4], %s170
        // Predicated region
        $region29: #{tpu_custom_call.1} parent=27 // pred_check
          %p172 = pneg %p55
        $region30: #{tpu_custom_call.1} parent=27 // pred_check_branch
          %174 = sbr.rel (%p172) target = $region32
        $region31: #{tpu_custom_call.1} parent=27 // pred_region
          %175 = dma.done %s168, 512
        $region32: #{tpu_custom_call.1} parent=27 // pred_fallthru
          _
        // Predicated region
        $region33: #{tpu_custom_call.1} parent=27 // pred_check
          %p176 = pneg %p76
        $region34: #{tpu_custom_call.1} parent=27 // pred_check_branch
          %178 = sbr.rel (%p176) target = $region36
        $region35: #{tpu_custom_call.1} parent=27 // pred_region
          %179 = dma.done [#allocation8], 8192
        $region36: #{tpu_custom_call.1} parent=27 // pred_fallthru
          _
        %s180 = sand.u32 %s42, 1
        %s181 = scalar_lea.sflag [#allocation5], %s180
        %s182 = sand.u32 %s42, 1
        %s183 = smul.addr %s182, 32
        %s184 = scalar_lea.vmem [#allocation4], %s183
        %p185 = pneg %p55
        %p186 = pneg %p52
        %p187 = pneg %p76
        %p188 = pneg %p73
        %p189 = pneg %p104
        %p190 = pneg %p101
        %s191 = sand.u32 %s91, 1
        %s192 = scalar_lea.sflag [#allocation6], %s191
        %s193 = sand.u32 %s91, 1
        %s194 = smul.addr %s193, 8
        %s195 = scalar_lea.vmem [#allocation9], %s194
        %s196 = smul.u32 4, %s25
        %s197 = smul.u32 4, %s25
        %p198 = scmp.eq.s32.totalorder %s25, 0
        // Predicated region
        $region37: #{tpu_custom_call.1} parent=27 // pred_check
          %p199 = pneg %p198
        $region38: #{tpu_custom_call.1} parent=27 // pred_check_branch
          %201 = sbr.rel (%p199) target = $region40
        $region39: #{tpu_custom_call.1} parent=27 // pred_region
          %202 = vst [vmem:[#allocation2] sm:$0x3] 0.0
          %203 = vst [vmem:[#allocation3] sm:$0x3] 0.0
        $region40: #{tpu_custom_call.1} parent=27 // pred_fallthru
          _
        %v204 = vld [vmem:[%s171] sm:$0xff]
        %v205 = vld [vmem:[#allocation2] sm:$0x3]
        %v206 = vld [vmem:[#allocation7] sm:$0xff]
        %v207 = vld [vmem:[#allocation7 + $0x8] sm:$0xff]
        %v208 = vld [vmem:[#allocation7 + $0x10] sm:$0xff]
        %v209 = vld [vmem:[#allocation7 + $0x18] sm:$0xff]
        %v210 = vld [vmem:[#allocation7 + $0x20] sm:$0xff]
        %v211 = vld [vmem:[#allocation7 + $0x28] sm:$0xff]
        %v212 = vld [vmem:[#allocation7 + $0x30] sm:$0xff]
        %v213 = vld [vmem:[#allocation7 + $0x38] sm:$0xff]
        %v214 = vld [vmem:[#allocation7 + $0x40] sm:$0xff]
        %v215 = vld [vmem:[#allocation7 + $0x48] sm:$0xff]
        %v216 = vld [vmem:[#allocation7 + $0x50] sm:$0xff]
        %v217 = vld [vmem:[#allocation7 + $0x58] sm:$0xff]
        %v218 = vld [vmem:[#allocation7 + $0x60] sm:$0xff]
        %v219 = vld [vmem:[#allocation7 + $0x68] sm:$0xff]
        %v220 = vld [vmem:[#allocation7 + $0x70] sm:$0xff]
        %v221 = vld [vmem:[#allocation7 + $0x78] sm:$0xff]
        %v222 = vld [vmem:[#allocation7 + $0x80] sm:$0xff]
        %v223 = vld [vmem:[#allocation7 + $0x88] sm:$0xff]
        %v224 = vld [vmem:[#allocation7 + $0x90] sm:$0xff]
        %v225 = vld [vmem:[#allocation7 + $0x98] sm:$0xff]
        %v226 = vld [vmem:[#allocation7 + $0xa0] sm:$0xff]
        %v227 = vld [vmem:[#allocation7 + $0xa8] sm:$0xff]
        %v228 = vld [vmem:[#allocation7 + $0xb0] sm:$0xff]
        %v229 = vld [vmem:[#allocation7 + $0xb8] sm:$0xff]
        %v230 = vld [vmem:[#allocation7 + $0xc0] sm:$0xff]
        %v231 = vld [vmem:[#allocation7 + $0xc8] sm:$0xff]
        %v232 = vld [vmem:[#allocation7 + $0xd0] sm:$0xff]
        %v233 = vld [vmem:[#allocation7 + $0xd8] sm:$0xff]
        %v234 = vld [vmem:[#allocation7 + $0xe0] sm:$0xff]
        %v235 = vld [vmem:[#allocation7 + $0xe8] sm:$0xff]
        %v236 = vld [vmem:[#allocation7 + $0xf0] sm:$0xff]
        %v237 = vld [vmem:[#allocation7 + $0xf8] sm:$0xff]
        %v238 = vld [vmem:[#allocation7 + $0x100] sm:$0xff]
        %v239 = vld [vmem:[#allocation7 + $0x108] sm:$0xff]
        %v240 = vld [vmem:[#allocation7 + $0x110] sm:$0xff]
        %v241 = vld [vmem:[#allocation7 + $0x118] sm:$0xff]
        %v242 = vld [vmem:[#allocation7 + $0x120] sm:$0xff]
        %v243 = vld [vmem:[#allocation7 + $0x128] sm:$0xff]
        %v244 = vld [vmem:[#allocation7 + $0x130] sm:$0xff]
        %v245 = vld [vmem:[#allocation7 + $0x138] sm:$0xff]
        %v246 = vld [vmem:[#allocation7 + $0x140] sm:$0xff]
        %v247 = vld [vmem:[#allocation7 + $0x148] sm:$0xff]
        %v248 = vld [vmem:[#allocation7 + $0x150] sm:$0xff]
        %v249 = vld [vmem:[#allocation7 + $0x158] sm:$0xff]
        %v250 = vld [vmem:[#allocation7 + $0x160] sm:$0xff]
        %v251 = vld [vmem:[#allocation7 + $0x168] sm:$0xff]
        %v252 = vld [vmem:[#allocation7 + $0x170] sm:$0xff]
        %v253 = vld [vmem:[#allocation7 + $0x178] sm:$0xff]
        %v254 = vld [vmem:[#allocation7 + $0x180] sm:$0xff]
        %v255 = vld [vmem:[#allocation7 + $0x188] sm:$0xff]
        %v256 = vld [vmem:[#allocation7 + $0x190] sm:$0xff]
        %v257 = vld [vmem:[#allocation7 + $0x198] sm:$0xff]
        %v258 = vld [vmem:[#allocation7 + $0x1a0] sm:$0xff]
        %v259 = vld [vmem:[#allocation7 + $0x1a8] sm:$0xff]
        %v260 = vld [vmem:[#allocation7 + $0x1b0] sm:$0xff]
        %v261 = vld [vmem:[#allocation7 + $0x1b8] sm:$0xff]
        %v262 = vld [vmem:[#allocation7 + $0x1c0] sm:$0xff]
        %v263 = vld [vmem:[#allocation7 + $0x1c8] sm:$0xff]
        %v264 = vld [vmem:[#allocation7 + $0x1d0] sm:$0xff]
        %v265 = vld [vmem:[#allocation7 + $0x1d8] sm:$0xff]
        %v266 = vld [vmem:[#allocation7 + $0x1e0] sm:$0xff]
        %v267 = vld [vmem:[#allocation7 + $0x1e8] sm:$0xff]
        %v268 = vld [vmem:[#allocation7 + $0x1f0] sm:$0xff]
        %v269 = vld [vmem:[#allocation7 + $0x1f8] sm:$0xff]
        %270 = vmatprep.subr.mxu0 %v267
        %271 = vmatpush1.msra.mxu0 %v266
        %272 = vmatprep.subr.mxu0 %v263
        %273 = vmatpush1.msra.mxu0 %v262
        %274 = vmatprep.subr.mxu0 %v259
        %275 = vmatpush1.msra.mxu0 %v258
        %276 = vmatprep.subr.mxu0 %v255
        %277 = vmatpush1.msra.mxu0 %v254
        %278 = vmatprep.subr.mxu0 %v251
        %279 = vmatpush1.msra.mxu0 %v250
        %280 = vmatprep.subr.mxu0 %v247
        %281 = vmatpush1.msra.mxu0 %v246
        %282 = vmatprep.subr.mxu0 %v243
        %283 = vmatpush1.msra.mxu0 %v242
        %284 = vmatprep.subr.mxu0 %v239
        %285 = vmatpush1.msra.mxu0 %v238
        %286 = vmatprep.subr.mxu0 %v235
        %287 = vmatpush1.msra.mxu0 %v234
        %288 = vmatprep.subr.mxu0 %v231
        %289 = vmatpush1.msra.mxu0 %v230
        %290 = vmatprep.subr.mxu0 %v227
        %291 = vmatpush1.msra.mxu0 %v226
        %292 = vmatprep.subr.mxu0 %v223
        %293 = vmatpush1.msra.mxu0 %v222
        %294 = vmatprep.subr.mxu0 %v219
        %295 = vmatpush1.msra.mxu0 %v218
        %296 = vmatprep.subr.mxu0 %v215
        %297 = vmatpush1.msra.mxu0 %v214
        %298 = vmatprep.subr.mxu0 %v211
        %299 = vmatpush1.msra.mxu0 %v210
        %300 = vmatprep.subr.mxu0 %v207
        %301 = vmatpush1.msra.mxu0 %v206
        %302 = vmatprep.subr.mxu0 0.0
        %303 = vmatpush2.msra.mxu0 0.0
        %304 = vmatprep.subr.mxu0 0.0
        %305 = vmatpush2.msra.mxu0 0.0
        %306 = vmatprep.subr.mxu0 0.0
        %307 = vmatpush2.msra.mxu0 0.0
        %308 = vmatprep.subr.mxu0 0.0
        %309 = vmatpush2.msra.mxu0 0.0
        %310 = vmatprep.subr.mxu0 0.0
        %311 = vmatpush2.msra.mxu0 0.0
        %312 = vmatprep.subr.mxu0 0.0
        %313 = vmatpush2.msra.mxu0 0.0
        %314 = vmatprep.subr.mxu0 0.0
        %315 = vmatpush2.msra.mxu0 0.0
        %316 = vmatprep.subr.mxu0 0.0
        %317 = vmatpush2.msra.mxu0 0.0
        %318 = vmatprep.subr.mxu0 0.0
        %319 = vmatpush2.msra.mxu0 0.0
        %320 = vmatprep.subr.mxu0 0.0
        %321 = vmatpush2.msra.mxu0 0.0
        %322 = vmatprep.subr.mxu0 0.0
        %323 = vmatpush2.msra.mxu0 0.0
        %324 = vmatprep.subr.mxu0 0.0
        %325 = vmatpush2.msra.mxu0 0.0
        %326 = vmatprep.subr.mxu0 0.0
        %327 = vmatpush2.msra.mxu0 0.0
        %328 = vmatprep.subr.mxu0 0.0
        %329 = vmatpush2.msra.mxu0 0.0
        %330 = vmatprep.subr.mxu0 0.0
        %331 = vmatpush2.msra.mxu0 0.0
        %332 = vmatprep.subr.mxu0 0.0
        %333 = vmatpush2.msra.mxu0 0.0
        %334 = vmatprep.mubr.f32.mxu0 0.0
        %335 = vmatmul.mubr.f32.gmra.mxu0 %v205
        %v336 = vpop.f32.mrf.mxu0
        %v337 = vadd.f32 0.0, %v336
        %v338 = vpop.f32.mrf.mxu0
        %v339 = vadd.f32 0.0, %v338
        %340 = vdwg.mxu0
        %341 = vmatprep.subr.mxu0 %v269
        %342 = vmatpush1.msra.mxu0 %v268
        %343 = vmatprep.subr.mxu0 %v265
        %344 = vmatpush1.msra.mxu0 %v264
        %345 = vmatprep.subr.mxu0 %v261
        %346 = vmatpush1.msra.mxu0 %v260
        %347 = vmatprep.subr.mxu0 %v257
        %348 = vmatpush1.msra.mxu0 %v256
        %349 = vmatprep.subr.mxu0 %v253
        %350 = vmatpush1.msra.mxu0 %v252
        %351 = vmatprep.subr.mxu0 %v249
        %352 = vmatpush1.msra.mxu0 %v248
        %353 = vmatprep.subr.mxu0 %v245
        %354 = vmatpush1.msra.mxu0 %v244
        %355 = vmatprep.subr.mxu0 %v241
        %356 = vmatpush1.msra.mxu0 %v240
        %357 = vmatprep.subr.mxu0 %v237
        %358 = vmatpush1.msra.mxu0 %v236
        %359 = vmatprep.subr.mxu0 %v233
        %360 = vmatpush1.msra.mxu0 %v232
        %361 = vmatprep.subr.mxu0 %v229
        %362 = vmatpush1.msra.mxu0 %v228
        %363 = vmatprep.subr.mxu0 %v225
        %364 = vmatpush1.msra.mxu0 %v224
        %365 = vmatprep.subr.mxu0 %v221
        %366 = vmatpush1.msra.mxu0 %v220
        %367 = vmatprep.subr.mxu0 %v217
        %368 = vmatpush1.msra.mxu0 %v216
        %369 = vmatprep.subr.mxu0 %v213
        %370 = vmatpush1.msra.mxu0 %v212
        %371 = vmatprep.subr.mxu0 %v209
        %372 = vmatpush1.msra.mxu0 %v208
        %373 = vmatprep.subr.mxu0 0.0
        %374 = vmatpush2.msra.mxu0 0.0
        %375 = vmatprep.subr.mxu0 0.0
        %376 = vmatpush2.msra.mxu0 0.0
        %377 = vmatprep.subr.mxu0 0.0
        %378 = vmatpush2.msra.mxu0 0.0
        %379 = vmatprep.subr.mxu0 0.0
        %380 = vmatpush2.msra.mxu0 0.0
        %381 = vmatprep.subr.mxu0 0.0
        %382 = vmatpush2.msra.mxu0 0.0
        %383 = vmatprep.subr.mxu0 0.0
        %384 = vmatpush2.msra.mxu0 0.0
        %385 = vmatprep.subr.mxu0 0.0
        %386 = vmatpush2.msra.mxu0 0.0
        %387 = vmatprep.subr.mxu0 0.0
        %388 = vmatpush2.msra.mxu0 0.0
        %389 = vmatprep.subr.mxu0 0.0
        %390 = vmatpush2.msra.mxu0 0.0
        %391 = vmatprep.subr.mxu0 0.0
        %392 = vmatpush2.msra.mxu0 0.0
        %393 = vmatprep.subr.mxu0 0.0
        %394 = vmatpush2.msra.mxu0 0.0
        %395 = vmatprep.subr.mxu0 0.0
        %396 = vmatpush2.msra.mxu0 0.0
        %397 = vmatprep.subr.mxu0 0.0
        %398 = vmatpush2.msra.mxu0 0.0
        %399 = vmatprep.subr.mxu0 0.0
        %400 = vmatpush2.msra.mxu0 0.0
        %401 = vmatprep.subr.mxu0 0.0
        %402 = vmatpush2.msra.mxu0 0.0
        %403 = vmatprep.subr.mxu0 0.0
        %404 = vmatpush2.msra.mxu0 0.0
        %405 = vmatprep.mubr.f32.mxu0 0.0
        %406 = vmatmul.mubr.f32.gmra.mxu0 %v205
        %v407 = vpop.f32.mrf.mxu0
        %v408 = vadd.f32 0.0, %v407
        %v409 = vpop.f32.mrf.mxu0
        %v410 = vadd.f32 0.0, %v409
        %411 = vdwg.mxu0
        %v416 = vcombine.low %v337, %v339
        %v417 = vcombine.low %v408, %v410
        %v419 = vunpack.c.l.s4 1983009808
        %v420 = vunpack.c.0.s8 %v419
        %v421 = vlaneseq
        %v422 = vshrl.u32 %v421, 7
        %v423 = vsub.s32 %v420, %v422
        %v424 = vrot.slane %v416, %v423
        %v426 = vunpack.c.l.s4 1983009808
        %v427 = vunpack.c.0.s8 %v426
        %v428 = vlaneseq
        %v429 = vshrl.u32 %v428, 7
        %v430 = vsub.s32 %v427, %v429
        %v431 = vrot.slane %v417, %v430
        %v432 = vcombine.low %v424, %v431
        %v434 = vadd.f32 %v204, %v432
        %v435 = vmul.f32 %v434, 0.5
        %v436 = vtanh.pop %v435
        %v437 = vmul.f32 %v436, 0.5
        %v438 = vadd.f32 %v437, 0.5
        %v440 = vrot.slane %v434, 2
        %v442 = vmul.f32 %v440, 0.5
        %v443 = vtanh.pop %v442
        %v444 = vmul.f32 %v443, 0.5
        %v445 = vadd.f32 %v444, 0.5
        %v446 = vrot.slane %v434, 4
        %v448 = vtanh.pop %v446
        %v449 = vrot.slane %v434, 6
        %v451 = vmul.f32 %v449, 0.5
        %v452 = vtanh.pop %v451
        %v453 = vmul.f32 %v452, 0.5
        %v454 = vadd.f32 %v453, 0.5
        %v455 = vld [vmem:[#allocation3] sm:$0x3]
        %v456 = vmul.f32 %v445, %v455
        %v457 = vmul.f32 %v438, %v448
        %v458 = vadd.f32 %v456, %v457
        %v459 = vtanh.pop %v458
        %v460 = vmul.f32 %v454, %v459
        %461 = vst [vmem:[#allocation3] sm:$0x3] %v458
        %462 = vst [vmem:[#allocation2] sm:$0x3] %v460
        %463 = vst [vmem:[%s195] sm:$0x3] %v460
        %s464 = scalar_lea.vmem %s171, 8 [#allocation4]
        %v465 = vld [vmem:[%s464] sm:$0xff]
        %v466 = vld [vmem:[#allocation2] sm:$0x3]
        %v467 = vld [vmem:[#allocation7] sm:$0xff]
        %v468 = vld [vmem:[#allocation7 + $0x8] sm:$0xff]
        %v469 = vld [vmem:[#allocation7 + $0x10] sm:$0xff]
        %v470 = vld [vmem:[#allocation7 + $0x18] sm:$0xff]
        %v471 = vld [vmem:[#allocation7 + $0x20] sm:$0xff]
        %v472 = vld [vmem:[#allocation7 + $0x28] sm:$0xff]
        %v473 = vld [vmem:[#allocation7 + $0x30] sm:$0xff]
        %v474 = vld [vmem:[#allocation7 + $0x38] sm:$0xff]
        %v475 = vld [vmem:[#allocation7 + $0x40] sm:$0xff]
        %v476 = vld [vmem:[#allocation7 + $0x48] sm:$0xff]
        %v477 = vld [vmem:[#allocation7 + $0x50] sm:$0xff]
        %v478 = vld [vmem:[#allocation7 + $0x58] sm:$0xff]
        %v479 = vld [vmem:[#allocation7 + $0x60] sm:$0xff]
        %v480 = vld [vmem:[#allocation7 + $0x68] sm:$0xff]
        %v481 = vld [vmem:[#allocation7 + $0x70] sm:$0xff]
        %v482 = vld [vmem:[#allocation7 + $0x78] sm:$0xff]
        %v483 = vld [vmem:[#allocation7 + $0x80] sm:$0xff]
        %v484 = vld [vmem:[#allocation7 + $0x88] sm:$0xff]
        %v485 = vld [vmem:[#allocation7 + $0x90] sm:$0xff]
        %v486 = vld [vmem:[#allocation7 + $0x98] sm:$0xff]
        %v487 = vld [vmem:[#allocation7 + $0xa0] sm:$0xff]
        %v488 = vld [vmem:[#allocation7 + $0xa8] sm:$0xff]
        %v489 = vld [vmem:[#allocation7 + $0xb0] sm:$0xff]
        %v490 = vld [vmem:[#allocation7 + $0xb8] sm:$0xff]
        %v491 = vld [vmem:[#allocation7 + $0xc0] sm:$0xff]
        %v492 = vld [vmem:[#allocation7 + $0xc8] sm:$0xff]
        %v493 = vld [vmem:[#allocation7 + $0xd0] sm:$0xff]
        %v494 = vld [vmem:[#allocation7 + $0xd8] sm:$0xff]
        %v495 = vld [vmem:[#allocation7 + $0xe0] sm:$0xff]
        %v496 = vld [vmem:[#allocation7 + $0xe8] sm:$0xff]
        %v497 = vld [vmem:[#allocation7 + $0xf0] sm:$0xff]
        %v498 = vld [vmem:[#allocation7 + $0xf8] sm:$0xff]
        %v499 = vld [vmem:[#allocation7 + $0x100] sm:$0xff]
        %v500 = vld [vmem:[#allocation7 + $0x108] sm:$0xff]
        %v501 = vld [vmem:[#allocation7 + $0x110] sm:$0xff]
        %v502 = vld [vmem:[#allocation7 + $0x118] sm:$0xff]
        %v503 = vld [vmem:[#allocation7 + $0x120] sm:$0xff]
        %v504 = vld [vmem:[#allocation7 + $0x128] sm:$0xff]
        %v505 = vld [vmem:[#allocation7 + $0x130] sm:$0xff]
        %v506 = vld [vmem:[#allocation7 + $0x138] sm:$0xff]
        %v507 = vld [vmem:[#allocation7 + $0x140] sm:$0xff]
        %v508 = vld [vmem:[#allocation7 + $0x148] sm:$0xff]
        %v509 = vld [vmem:[#allocation7 + $0x150] sm:$0xff]
        %v510 = vld [vmem:[#allocation7 + $0x158] sm:$0xff]
        %v511 = vld [vmem:[#allocation7 + $0x160] sm:$0xff]
        %v512 = vld [vmem:[#allocation7 + $0x168] sm:$0xff]
        %v513 = vld [vmem:[#allocation7 + $0x170] sm:$0xff]
        %v514 = vld [vmem:[#allocation7 + $0x178] sm:$0xff]
        %v515 = vld [vmem:[#allocation7 + $0x180] sm:$0xff]
        %v516 = vld [vmem:[#allocation7 + $0x188] sm:$0xff]
        %v517 = vld [vmem:[#allocation7 + $0x190] sm:$0xff]
        %v518 = vld [vmem:[#allocation7 + $0x198] sm:$0xff]
        %v519 = vld [vmem:[#allocation7 + $0x1a0] sm:$0xff]
        %v520 = vld [vmem:[#allocation7 + $0x1a8] sm:$0xff]
        %v521 = vld [vmem:[#allocation7 + $0x1b0] sm:$0xff]
        %v522 = vld [vmem:[#allocation7 + $0x1b8] sm:$0xff]
        %v523 = vld [vmem:[#allocation7 + $0x1c0] sm:$0xff]
        %v524 = vld [vmem:[#allocation7 + $0x1c8] sm:$0xff]
        %v525 = vld [vmem:[#allocation7 + $0x1d0] sm:$0xff]
        %v526 = vld [vmem:[#allocation7 + $0x1d8] sm:$0xff]
        %v527 = vld [vmem:[#allocation7 + $0x1e0] sm:$0xff]
        %v528 = vld [vmem:[#allocation7 + $0x1e8] sm:$0xff]
        %v529 = vld [vmem:[#allocation7 + $0x1f0] sm:$0xff]
        %v530 = vld [vmem:[#allocation7 + $0x1f8] sm:$0xff]
        %531 = vmatprep.subr.mxu0 %v528
        %532 = vmatpush1.msra.mxu0 %v527
        %533 = vmatprep.subr.mxu0 %v524
        %534 = vmatpush1.msra.mxu0 %v523
        %535 = vmatprep.subr.mxu0 %v520
        %536 = vmatpush1.msra.mxu0 %v519
        %537 = vmatprep.subr.mxu0 %v516
        %538 = vmatpush1.msra.mxu0 %v515
        %539 = vmatprep.subr.mxu0 %v512
        %540 = vmatpush1.msra.mxu0 %v511
        %541 = vmatprep.subr.mxu0 %v508
        %542 = vmatpush1.msra.mxu0 %v507
        %543 = vmatprep.subr.mxu0 %v504
        %544 = vmatpush1.msra.mxu0 %v503
        %545 = vmatprep.subr.mxu0 %v500
        %546 = vmatpush1.msra.mxu0 %v499
        %547 = vmatprep.subr.mxu0 %v496
        %548 = vmatpush1.msra.mxu0 %v495
        %549 = vmatprep.subr.mxu0 %v492
        %550 = vmatpush1.msra.mxu0 %v491
        %551 = vmatprep.subr.mxu0 %v488
        %552 = vmatpush1.msra.mxu0 %v487
        %553 = vmatprep.subr.mxu0 %v484
        %554 = vmatpush1.msra.mxu0 %v483
        %555 = vmatprep.subr.mxu0 %v480
        %556 = vmatpush1.msra.mxu0 %v479
        %557 = vmatprep.subr.mxu0 %v476
        %558 = vmatpush1.msra.mxu0 %v475
        %559 = vmatprep.subr.mxu0 %v472
        %560 = vmatpush1.msra.mxu0 %v471
        %561 = vmatprep.subr.mxu0 %v468
        %562 = vmatpush1.msra.mxu0 %v467
        %563 = vmatprep.subr.mxu0 0.0
        %564 = vmatpush2.msra.mxu0 0.0
        %565 = vmatprep.subr.mxu0 0.0
        %566 = vmatpush2.msra.mxu0 0.0
        %567 = vmatprep.subr.mxu0 0.0
        %568 = vmatpush2.msra.mxu0 0.0
        %569 = vmatprep.subr.mxu0 0.0
        %570 = vmatpush2.msra.mxu0 0.0
        %571 = vmatprep.subr.mxu0 0.0
        %572 = vmatpush2.msra.mxu0 0.0
        %573 = vmatprep.subr.mxu0 0.0
        %574 = vmatpush2.msra.mxu0 0.0
        %575 = vmatprep.subr.mxu0 0.0
        %576 = vmatpush2.msra.mxu0 0.0
        %577 = vmatprep.subr.mxu0 0.0
        %578 = vmatpush2.msra.mxu0 0.0
        %579 = vmatprep.subr.mxu0 0.0
        %580 = vmatpush2.msra.mxu0 0.0
        %581 = vmatprep.subr.mxu0 0.0
        %582 = vmatpush2.msra.mxu0 0.0
        %583 = vmatprep.subr.mxu0 0.0
        %584 = vmatpush2.msra.mxu0 0.0
        %585 = vmatprep.subr.mxu0 0.0
        %586 = vmatpush2.msra.mxu0 0.0
        %587 = vmatprep.subr.mxu0 0.0
        %588 = vmatpush2.msra.mxu0 0.0
        %589 = vmatprep.subr.mxu0 0.0
        %590 = vmatpush2.msra.mxu0 0.0
        %591 = vmatprep.subr.mxu0 0.0
        %592 = vmatpush2.msra.mxu0 0.0
        %593 = vmatprep.subr.mxu0 0.0
        %594 = vmatpush2.msra.mxu0 0.0
        %595 = vmatprep.mubr.f32.mxu0 0.0
        %596 = vmatmul.mubr.f32.gmra.mxu0 %v466
        %v597 = vpop.f32.mrf.mxu0
        %v598 = vadd.f32 0.0, %v597
        %v599 = vpop.f32.mrf.mxu0
        %v600 = vadd.f32 0.0, %v599
        %601 = vdwg.mxu0
        %602 = vmatprep.subr.mxu0 %v530
        %603 = vmatpush1.msra.mxu0 %v529
        %604 = vmatprep.subr.mxu0 %v526
        %605 = vmatpush1.msra.mxu0 %v525
        %606 = vmatprep.subr.mxu0 %v522
        %607 = vmatpush1.msra.mxu0 %v521
        %608 = vmatprep.subr.mxu0 %v518
        %609 = vmatpush1.msra.mxu0 %v517
        %610 = vmatprep.subr.mxu0 %v514
        %611 = vmatpush1.msra.mxu0 %v513
        %612 = vmatprep.subr.mxu0 %v510
        %613 = vmatpush1.msra.mxu0 %v509
        %614 = vmatprep.subr.mxu0 %v506
        %615 = vmatpush1.msra.mxu0 %v505
        %616 = vmatprep.subr.mxu0 %v502
        %617 = vmatpush1.msra.mxu0 %v501
        %618 = vmatprep.subr.mxu0 %v498
        %619 = vmatpush1.msra.mxu0 %v497
        %620 = vmatprep.subr.mxu0 %v494
        %621 = vmatpush1.msra.mxu0 %v493
        %622 = vmatprep.subr.mxu0 %v490
        %623 = vmatpush1.msra.mxu0 %v489
        %624 = vmatprep.subr.mxu0 %v486
        %625 = vmatpush1.msra.mxu0 %v485
        %626 = vmatprep.subr.mxu0 %v482
        %627 = vmatpush1.msra.mxu0 %v481
        %628 = vmatprep.subr.mxu0 %v478
        %629 = vmatpush1.msra.mxu0 %v477
        %630 = vmatprep.subr.mxu0 %v474
        %631 = vmatpush1.msra.mxu0 %v473
        %632 = vmatprep.subr.mxu0 %v470
        %633 = vmatpush1.msra.mxu0 %v469
        %634 = vmatprep.subr.mxu0 0.0
        %635 = vmatpush2.msra.mxu0 0.0
        %636 = vmatprep.subr.mxu0 0.0
        %637 = vmatpush2.msra.mxu0 0.0
        %638 = vmatprep.subr.mxu0 0.0
        %639 = vmatpush2.msra.mxu0 0.0
        %640 = vmatprep.subr.mxu0 0.0
        %641 = vmatpush2.msra.mxu0 0.0
        %642 = vmatprep.subr.mxu0 0.0
        %643 = vmatpush2.msra.mxu0 0.0
        %644 = vmatprep.subr.mxu0 0.0
        %645 = vmatpush2.msra.mxu0 0.0
        %646 = vmatprep.subr.mxu0 0.0
        %647 = vmatpush2.msra.mxu0 0.0
        %648 = vmatprep.subr.mxu0 0.0
        %649 = vmatpush2.msra.mxu0 0.0
        %650 = vmatprep.subr.mxu0 0.0
        %651 = vmatpush2.msra.mxu0 0.0
        %652 = vmatprep.subr.mxu0 0.0
        %653 = vmatpush2.msra.mxu0 0.0
        %654 = vmatprep.subr.mxu0 0.0
        %655 = vmatpush2.msra.mxu0 0.0
        %656 = vmatprep.subr.mxu0 0.0
        %657 = vmatpush2.msra.mxu0 0.0
        %658 = vmatprep.subr.mxu0 0.0
        %659 = vmatpush2.msra.mxu0 0.0
        %660 = vmatprep.subr.mxu0 0.0
        %661 = vmatpush2.msra.mxu0 0.0
        %662 = vmatprep.subr.mxu0 0.0
        %663 = vmatpush2.msra.mxu0 0.0
        %664 = vmatprep.subr.mxu0 0.0
        %665 = vmatpush2.msra.mxu0 0.0
        %666 = vmatprep.mubr.f32.mxu0 0.0
        %667 = vmatmul.mubr.f32.gmra.mxu0 %v466
        %v668 = vpop.f32.mrf.mxu0
        %v669 = vadd.f32 0.0, %v668
        %v670 = vpop.f32.mrf.mxu0
        %v671 = vadd.f32 0.0, %v670
        %672 = vdwg.mxu0
        %v677 = vcombine.low %v598, %v600
        %v678 = vcombine.low %v669, %v671
        %v680 = vunpack.c.l.s4 1983009808
        %v681 = vunpack.c.0.s8 %v680
        %v682 = vlaneseq
        %v683 = vshrl.u32 %v682, 7
        %v684 = vsub.s32 %v681, %v683
        %v685 = vrot.slane %v677, %v684
        %v687 = vunpack.c.l.s4 1983009808
        %v688 = vunpack.c.0.s8 %v687
        %v689 = vlaneseq
        %v690 = vshrl.u32 %v689, 7
        %v691 = vsub.s32 %v688, %v690
        %v692 = vrot.slane %v678, %v691
        %v693 = vcombine.low %v685, %v692
        %v695 = vadd.f32 %v465, %v693
        %v696 = vmul.f32 %v695, 0.5
        %v697 = vtanh.pop %v696
        %v698 = vmul.f32 %v697, 0.5
        %v699 = vadd.f32 %v698, 0.5
        %v701 = vrot.slane %v695, 2
        %v703 = vmul.f32 %v701, 0.5
        %v704 = vtanh.pop %v703
        %v705 = vmul.f32 %v704, 0.5
        %v706 = vadd.f32 %v705, 0.5
        %v707 = vrot.slane %v695, 4
        %v709 = vtanh.pop %v707
        %v710 = vrot.slane %v695, 6
        %v712 = vmul.f32 %v710, 0.5
        %v713 = vtanh.pop %v712
        %v714 = vmul.f32 %v713, 0.5
        %v715 = vadd.f32 %v714, 0.5
        %v716 = vld [vmem:[#allocation3] sm:$0x3]
        %v717 = vmul.f32 %v706, %v716
        %v718 = vmul.f32 %v699, %v709
        %v719 = vadd.f32 %v717, %v718
        %v720 = vtanh.pop %v719
        %v721 = vmul.f32 %v715, %v720
        %722 = vst [vmem:[#allocation3] sm:$0x3] %v719
        %723 = vst [vmem:[#allocation2] sm:$0x3] %v721
        %s724 = scalar_lea.vmem %s195, 2 [#allocation9]
        %725 = vst [vmem:[%s724] sm:$0x3] %v721
        %s726 = scalar_lea.vmem %s171, 16 [#allocation4]
        %v727 = vld [vmem:[%s726] sm:$0xff]
        %v728 = vld [vmem:[#allocation2] sm:$0x3]
        %v729 = vld [vmem:[#allocation7] sm:$0xff]
        %v730 = vld [vmem:[#allocation7 + $0x8] sm:$0xff]
        %v731 = vld [vmem:[#allocation7 + $0x10] sm:$0xff]
        %v732 = vld [vmem:[#allocation7 + $0x18] sm:$0xff]
        %v733 = vld [vmem:[#allocation7 + $0x20] sm:$0xff]
        %v734 = vld [vmem:[#allocation7 + $0x28] sm:$0xff]
        %v735 = vld [vmem:[#allocation7 + $0x30] sm:$0xff]
        %v736 = vld [vmem:[#allocation7 + $0x38] sm:$0xff]
        %v737 = vld [vmem:[#allocation7 + $0x40] sm:$0xff]
        %v738 = vld [vmem:[#allocation7 + $0x48] sm:$0xff]
        %v739 = vld [vmem:[#allocation7 + $0x50] sm:$0xff]
        %v740 = vld [vmem:[#allocation7 + $0x58] sm:$0xff]
        %v741 = vld [vmem:[#allocation7 + $0x60] sm:$0xff]
        %v742 = vld [vmem:[#allocation7 + $0x68] sm:$0xff]
        %v743 = vld [vmem:[#allocation7 + $0x70] sm:$0xff]
        %v744 = vld [vmem:[#allocation7 + $0x78] sm:$0xff]
        %v745 = vld [vmem:[#allocation7 + $0x80] sm:$0xff]
        %v746 = vld [vmem:[#allocation7 + $0x88] sm:$0xff]
        %v747 = vld [vmem:[#allocation7 + $0x90] sm:$0xff]
        %v748 = vld [vmem:[#allocation7 + $0x98] sm:$0xff]
        %v749 = vld [vmem:[#allocation7 + $0xa0] sm:$0xff]
        %v750 = vld [vmem:[#allocation7 + $0xa8] sm:$0xff]
        %v751 = vld [vmem:[#allocation7 + $0xb0] sm:$0xff]
        %v752 = vld [vmem:[#allocation7 + $0xb8] sm:$0xff]
        %v753 = vld [vmem:[#allocation7 + $0xc0] sm:$0xff]
        %v754 = vld [vmem:[#allocation7 + $0xc8] sm:$0xff]
        %v755 = vld [vmem:[#allocation7 + $0xd0] sm:$0xff]
        %v756 = vld [vmem:[#allocation7 + $0xd8] sm:$0xff]
        %v757 = vld [vmem:[#allocation7 + $0xe0] sm:$0xff]
        %v758 = vld [vmem:[#allocation7 + $0xe8] sm:$0xff]
        %v759 = vld [vmem:[#allocation7 + $0xf0] sm:$0xff]
        %v760 = vld [vmem:[#allocation7 + $0xf8] sm:$0xff]
        %v761 = vld [vmem:[#allocation7 + $0x100] sm:$0xff]
        %v762 = vld [vmem:[#allocation7 + $0x108] sm:$0xff]
        %v763 = vld [vmem:[#allocation7 + $0x110] sm:$0xff]
        %v764 = vld [vmem:[#allocation7 + $0x118] sm:$0xff]
        %v765 = vld [vmem:[#allocation7 + $0x120] sm:$0xff]
        %v766 = vld [vmem:[#allocation7 + $0x128] sm:$0xff]
        %v767 = vld [vmem:[#allocation7 + $0x130] sm:$0xff]
        %v768 = vld [vmem:[#allocation7 + $0x138] sm:$0xff]
        %v769 = vld [vmem:[#allocation7 + $0x140] sm:$0xff]
        %v770 = vld [vmem:[#allocation7 + $0x148] sm:$0xff]
        %v771 = vld [vmem:[#allocation7 + $0x150] sm:$0xff]
        %v772 = vld [vmem:[#allocation7 + $0x158] sm:$0xff]
        %v773 = vld [vmem:[#allocation7 + $0x160] sm:$0xff]
        %v774 = vld [vmem:[#allocation7 + $0x168] sm:$0xff]
        %v775 = vld [vmem:[#allocation7 + $0x170] sm:$0xff]
        %v776 = vld [vmem:[#allocation7 + $0x178] sm:$0xff]
        %v777 = vld [vmem:[#allocation7 + $0x180] sm:$0xff]
        %v778 = vld [vmem:[#allocation7 + $0x188] sm:$0xff]
        %v779 = vld [vmem:[#allocation7 + $0x190] sm:$0xff]
        %v780 = vld [vmem:[#allocation7 + $0x198] sm:$0xff]
        %v781 = vld [vmem:[#allocation7 + $0x1a0] sm:$0xff]
        %v782 = vld [vmem:[#allocation7 + $0x1a8] sm:$0xff]
        %v783 = vld [vmem:[#allocation7 + $0x1b0] sm:$0xff]
        %v784 = vld [vmem:[#allocation7 + $0x1b8] sm:$0xff]
        %v785 = vld [vmem:[#allocation7 + $0x1c0] sm:$0xff]
        %v786 = vld [vmem:[#allocation7 + $0x1c8] sm:$0xff]
        %v787 = vld [vmem:[#allocation7 + $0x1d0] sm:$0xff]
        %v788 = vld [vmem:[#allocation7 + $0x1d8] sm:$0xff]
        %v789 = vld [vmem:[#allocation7 + $0x1e0] sm:$0xff]
        %v790 = vld [vmem:[#allocation7 + $0x1e8] sm:$0xff]
        %v791 = vld [vmem:[#allocation7 + $0x1f0] sm:$0xff]
        %v792 = vld [vmem:[#allocation7 + $0x1f8] sm:$0xff]
        %793 = vmatprep.subr.mxu0 %v790
        %794 = vmatpush1.msra.mxu0 %v789
        %795 = vmatprep.subr.mxu0 %v786
        %796 = vmatpush1.msra.mxu0 %v785
        %797 = vmatprep.subr.mxu0 %v782
        %798 = vmatpush1.msra.mxu0 %v781
        %799 = vmatprep.subr.mxu0 %v778
        %800 = vmatpush1.msra.mxu0 %v777
        %801 = vmatprep.subr.mxu0 %v774
        %802 = vmatpush1.msra.mxu0 %v773
        %803 = vmatprep.subr.mxu0 %v770
        %804 = vmatpush1.msra.mxu0 %v769
        %805 = vmatprep.subr.mxu0 %v766
        %806 = vmatpush1.msra.mxu0 %v765
        %807 = vmatprep.subr.mxu0 %v762
        %808 = vmatpush1.msra.mxu0 %v761
        %809 = vmatprep.subr.mxu0 %v758
        %810 = vmatpush1.msra.mxu0 %v757
        %811 = vmatprep.subr.mxu0 %v754
        %812 = vmatpush1.msra.mxu0 %v753
        %813 = vmatprep.subr.mxu0 %v750
        %814 = vmatpush1.msra.mxu0 %v749
        %815 = vmatprep.subr.mxu0 %v746
        %816 = vmatpush1.msra.mxu0 %v745
        %817 = vmatprep.subr.mxu0 %v742
        %818 = vmatpush1.msra.mxu0 %v741
        %819 = vmatprep.subr.mxu0 %v738
        %820 = vmatpush1.msra.mxu0 %v737
        %821 = vmatprep.subr.mxu0 %v734
        %822 = vmatpush1.msra.mxu0 %v733
        %823 = vmatprep.subr.mxu0 %v730
        %824 = vmatpush1.msra.mxu0 %v729
        %825 = vmatprep.subr.mxu0 0.0
        %826 = vmatpush2.msra.mxu0 0.0
        %827 = vmatprep.subr.mxu0 0.0
        %828 = vmatpush2.msra.mxu0 0.0
        %829 = vmatprep.subr.mxu0 0.0
        %830 = vmatpush2.msra.mxu0 0.0
        %831 = vmatprep.subr.mxu0 0.0
        %832 = vmatpush2.msra.mxu0 0.0
        %833 = vmatprep.subr.mxu0 0.0
        %834 = vmatpush2.msra.mxu0 0.0
        %835 = vmatprep.subr.mxu0 0.0
        %836 = vmatpush2.msra.mxu0 0.0
        %837 = vmatprep.subr.mxu0 0.0
        %838 = vmatpush2.msra.mxu0 0.0
        %839 = vmatprep.subr.mxu0 0.0
        %840 = vmatpush2.msra.mxu0 0.0
        %841 = vmatprep.subr.mxu0 0.0
        %842 = vmatpush2.msra.mxu0 0.0
        %843 = vmatprep.subr.mxu0 0.0
        %844 = vmatpush2.msra.mxu0 0.0
        %845 = vmatprep.subr.mxu0 0.0
        %846 = vmatpush2.msra.mxu0 0.0
        %847 = vmatprep.subr.mxu0 0.0
        %848 = vmatpush2.msra.mxu0 0.0
        %849 = vmatprep.subr.mxu0 0.0
        %850 = vmatpush2.msra.mxu0 0.0
        %851 = vmatprep.subr.mxu0 0.0
        %852 = vmatpush2.msra.mxu0 0.0
        %853 = vmatprep.subr.mxu0 0.0
        %854 = vmatpush2.msra.mxu0 0.0
        %855 = vmatprep.subr.mxu0 0.0
        %856 = vmatpush2.msra.mxu0 0.0
        %857 = vmatprep.mubr.f32.mxu0 0.0
        %858 = vmatmul.mubr.f32.gmra.mxu0 %v728
        %v859 = vpop.f32.mrf.mxu0
        %v860 = vadd.f32 0.0, %v859
        %v861 = vpop.f32.mrf.mxu0
        %v862 = vadd.f32 0.0, %v861
        %863 = vdwg.mxu0
        %864 = vmatprep.subr.mxu0 %v792
        %865 = vmatpush1.msra.mxu0 %v791
        %866 = vmatprep.subr.mxu0 %v788
        %867 = vmatpush1.msra.mxu0 %v787
        %868 = vmatprep.subr.mxu0 %v784
        %869 = vmatpush1.msra.mxu0 %v783
        %870 = vmatprep.subr.mxu0 %v780
        %871 = vmatpush1.msra.mxu0 %v779
        %872 = vmatprep.subr.mxu0 %v776
        %873 = vmatpush1.msra.mxu0 %v775
        %874 = vmatprep.subr.mxu0 %v772
        %875 = vmatpush1.msra.mxu0 %v771
        %876 = vmatprep.subr.mxu0 %v768
        %877 = vmatpush1.msra.mxu0 %v767
        %878 = vmatprep.subr.mxu0 %v764
        %879 = vmatpush1.msra.mxu0 %v763
        %880 = vmatprep.subr.mxu0 %v760
        %881 = vmatpush1.msra.mxu0 %v759
        %882 = vmatprep.subr.mxu0 %v756
        %883 = vmatpush1.msra.mxu0 %v755
        %884 = vmatprep.subr.mxu0 %v752
        %885 = vmatpush1.msra.mxu0 %v751
        %886 = vmatprep.subr.mxu0 %v748
        %887 = vmatpush1.msra.mxu0 %v747
        %888 = vmatprep.subr.mxu0 %v744
        %889 = vmatpush1.msra.mxu0 %v743
        %890 = vmatprep.subr.mxu0 %v740
        %891 = vmatpush1.msra.mxu0 %v739
        %892 = vmatprep.subr.mxu0 %v736
        %893 = vmatpush1.msra.mxu0 %v735
        %894 = vmatprep.subr.mxu0 %v732
        %895 = vmatpush1.msra.mxu0 %v731
        %896 = vmatprep.subr.mxu0 0.0
        %897 = vmatpush2.msra.mxu0 0.0
        %898 = vmatprep.subr.mxu0 0.0
        %899 = vmatpush2.msra.mxu0 0.0
        %900 = vmatprep.subr.mxu0 0.0
        %901 = vmatpush2.msra.mxu0 0.0
        %902 = vmatprep.subr.mxu0 0.0
        %903 = vmatpush2.msra.mxu0 0.0
        %904 = vmatprep.subr.mxu0 0.0
        %905 = vmatpush2.msra.mxu0 0.0
        %906 = vmatprep.subr.mxu0 0.0
        %907 = vmatpush2.msra.mxu0 0.0
        %908 = vmatprep.subr.mxu0 0.0
        %909 = vmatpush2.msra.mxu0 0.0
        %910 = vmatprep.subr.mxu0 0.0
        %911 = vmatpush2.msra.mxu0 0.0
        %912 = vmatprep.subr.mxu0 0.0
        %913 = vmatpush2.msra.mxu0 0.0
        %914 = vmatprep.subr.mxu0 0.0
        %915 = vmatpush2.msra.mxu0 0.0
        %916 = vmatprep.subr.mxu0 0.0
        %917 = vmatpush2.msra.mxu0 0.0
        %918 = vmatprep.subr.mxu0 0.0
        %919 = vmatpush2.msra.mxu0 0.0
        %920 = vmatprep.subr.mxu0 0.0
        %921 = vmatpush2.msra.mxu0 0.0
        %922 = vmatprep.subr.mxu0 0.0
        %923 = vmatpush2.msra.mxu0 0.0
        %924 = vmatprep.subr.mxu0 0.0
        %925 = vmatpush2.msra.mxu0 0.0
        %926 = vmatprep.subr.mxu0 0.0
        %927 = vmatpush2.msra.mxu0 0.0
        %928 = vmatprep.mubr.f32.mxu0 0.0
        %929 = vmatmul.mubr.f32.gmra.mxu0 %v728
        %v930 = vpop.f32.mrf.mxu0
        %v931 = vadd.f32 0.0, %v930
        %v932 = vpop.f32.mrf.mxu0
        %v933 = vadd.f32 0.0, %v932
        %934 = vdwg.mxu0
        %v939 = vcombine.low %v860, %v862
        %v940 = vcombine.low %v931, %v933
        %v942 = vunpack.c.l.s4 1983009808
        %v943 = vunpack.c.0.s8 %v942
        %v944 = vlaneseq
        %v945 = vshrl.u32 %v944, 7
        %v946 = vsub.s32 %v943, %v945
        %v947 = vrot.slane %v939, %v946
        %v949 = vunpack.c.l.s4 1983009808
        %v950 = vunpack.c.0.s8 %v949
        %v951 = vlaneseq
        %v952 = vshrl.u32 %v951, 7
        %v953 = vsub.s32 %v950, %v952
        %v954 = vrot.slane %v940, %v953
        %v955 = vcombine.low %v947, %v954
        %v957 = vadd.f32 %v727, %v955
        %v958 = vmul.f32 %v957, 0.5
        %v959 = vtanh.pop %v958
        %v960 = vmul.f32 %v959, 0.5
        %v961 = vadd.f32 %v960, 0.5
        %v963 = vrot.slane %v957, 2
        %v965 = vmul.f32 %v963, 0.5
        %v966 = vtanh.pop %v965
        %v967 = vmul.f32 %v966, 0.5
        %v968 = vadd.f32 %v967, 0.5
        %v969 = vrot.slane %v957, 4
        %v971 = vtanh.pop %v969
        %v972 = vrot.slane %v957, 6
        %v974 = vmul.f32 %v972, 0.5
        %v975 = vtanh.pop %v974
        %v976 = vmul.f32 %v975, 0.5
        %v977 = vadd.f32 %v976, 0.5
        %v978 = vld [vmem:[#allocation3] sm:$0x3]
        %v979 = vmul.f32 %v968, %v978
        %v980 = vmul.f32 %v961, %v971
        %v981 = vadd.f32 %v979, %v980
        %v982 = vtanh.pop %v981
        %v983 = vmul.f32 %v977, %v982
        %984 = vst [vmem:[#allocation3] sm:$0x3] %v981
        %985 = vst [vmem:[#allocation2] sm:$0x3] %v983
        %s986 = scalar_lea.vmem %s195, 4 [#allocation9]
        %987 = vst [vmem:[%s986] sm:$0x3] %v983
        %s988 = scalar_lea.vmem %s171, 24 [#allocation4]
        %v989 = vld [vmem:[%s988] sm:$0xff]
        %v990 = vld [vmem:[#allocation2] sm:$0x3]
        %v991 = vld [vmem:[#allocation7] sm:$0xff]
        %v992 = vld [vmem:[#allocation7 + $0x8] sm:$0xff]
        %v993 = vld [vmem:[#allocation7 + $0x10] sm:$0xff]
        %v994 = vld [vmem:[#allocation7 + $0x18] sm:$0xff]
        %v995 = vld [vmem:[#allocation7 + $0x20] sm:$0xff]
        %v996 = vld [vmem:[#allocation7 + $0x28] sm:$0xff]
        %v997 = vld [vmem:[#allocation7 + $0x30] sm:$0xff]
        %v998 = vld [vmem:[#allocation7 + $0x38] sm:$0xff]
        %v999 = vld [vmem:[#allocation7 + $0x40] sm:$0xff]
        %v1000 = vld [vmem:[#allocation7 + $0x48] sm:$0xff]
        %v1001 = vld [vmem:[#allocation7 + $0x50] sm:$0xff]
        %v1002 = vld [vmem:[#allocation7 + $0x58] sm:$0xff]
        %v1003 = vld [vmem:[#allocation7 + $0x60] sm:$0xff]
        %v1004 = vld [vmem:[#allocation7 + $0x68] sm:$0xff]
        %v1005 = vld [vmem:[#allocation7 + $0x70] sm:$0xff]
        %v1006 = vld [vmem:[#allocation7 + $0x78] sm:$0xff]
        %v1007 = vld [vmem:[#allocation7 + $0x80] sm:$0xff]
        %v1008 = vld [vmem:[#allocation7 + $0x88] sm:$0xff]
        %v1009 = vld [vmem:[#allocation7 + $0x90] sm:$0xff]
        %v1010 = vld [vmem:[#allocation7 + $0x98] sm:$0xff]
        %v1011 = vld [vmem:[#allocation7 + $0xa0] sm:$0xff]
        %v1012 = vld [vmem:[#allocation7 + $0xa8] sm:$0xff]
        %v1013 = vld [vmem:[#allocation7 + $0xb0] sm:$0xff]
        %v1014 = vld [vmem:[#allocation7 + $0xb8] sm:$0xff]
        %v1015 = vld [vmem:[#allocation7 + $0xc0] sm:$0xff]
        %v1016 = vld [vmem:[#allocation7 + $0xc8] sm:$0xff]
        %v1017 = vld [vmem:[#allocation7 + $0xd0] sm:$0xff]
        %v1018 = vld [vmem:[#allocation7 + $0xd8] sm:$0xff]
        %v1019 = vld [vmem:[#allocation7 + $0xe0] sm:$0xff]
        %v1020 = vld [vmem:[#allocation7 + $0xe8] sm:$0xff]
        %v1021 = vld [vmem:[#allocation7 + $0xf0] sm:$0xff]
        %v1022 = vld [vmem:[#allocation7 + $0xf8] sm:$0xff]
        %v1023 = vld [vmem:[#allocation7 + $0x100] sm:$0xff]
        %v1024 = vld [vmem:[#allocation7 + $0x108] sm:$0xff]
        %v1025 = vld [vmem:[#allocation7 + $0x110] sm:$0xff]
        %v1026 = vld [vmem:[#allocation7 + $0x118] sm:$0xff]
        %v1027 = vld [vmem:[#allocation7 + $0x120] sm:$0xff]
        %v1028 = vld [vmem:[#allocation7 + $0x128] sm:$0xff]
        %v1029 = vld [vmem:[#allocation7 + $0x130] sm:$0xff]
        %v1030 = vld [vmem:[#allocation7 + $0x138] sm:$0xff]
        %v1031 = vld [vmem:[#allocation7 + $0x140] sm:$0xff]
        %v1032 = vld [vmem:[#allocation7 + $0x148] sm:$0xff]
        %v1033 = vld [vmem:[#allocation7 + $0x150] sm:$0xff]
        %v1034 = vld [vmem:[#allocation7 + $0x158] sm:$0xff]
        %v1035 = vld [vmem:[#allocation7 + $0x160] sm:$0xff]
        %v1036 = vld [vmem:[#allocation7 + $0x168] sm:$0xff]
        %v1037 = vld [vmem:[#allocation7 + $0x170] sm:$0xff]
        %v1038 = vld [vmem:[#allocation7 + $0x178] sm:$0xff]
        %v1039 = vld [vmem:[#allocation7 + $0x180] sm:$0xff]
        %v1040 = vld [vmem:[#allocation7 + $0x188] sm:$0xff]
        %v1041 = vld [vmem:[#allocation7 + $0x190] sm:$0xff]
        %v1042 = vld [vmem:[#allocation7 + $0x198] sm:$0xff]
        %v1043 = vld [vmem:[#allocation7 + $0x1a0] sm:$0xff]
        %v1044 = vld [vmem:[#allocation7 + $0x1a8] sm:$0xff]
        %v1045 = vld [vmem:[#allocation7 + $0x1b0] sm:$0xff]
        %v1046 = vld [vmem:[#allocation7 + $0x1b8] sm:$0xff]
        %v1047 = vld [vmem:[#allocation7 + $0x1c0] sm:$0xff]
        %v1048 = vld [vmem:[#allocation7 + $0x1c8] sm:$0xff]
        %v1049 = vld [vmem:[#allocation7 + $0x1d0] sm:$0xff]
        %v1050 = vld [vmem:[#allocation7 + $0x1d8] sm:$0xff]
        %v1051 = vld [vmem:[#allocation7 + $0x1e0] sm:$0xff]
        %v1052 = vld [vmem:[#allocation7 + $0x1e8] sm:$0xff]
        %v1053 = vld [vmem:[#allocation7 + $0x1f0] sm:$0xff]
        %v1054 = vld [vmem:[#allocation7 + $0x1f8] sm:$0xff]
        %1055 = vmatprep.subr.mxu0 %v1052
        %1056 = vmatpush1.msra.mxu0 %v1051
        %1057 = vmatprep.subr.mxu0 %v1048
        %1058 = vmatpush1.msra.mxu0 %v1047
        %1059 = vmatprep.subr.mxu0 %v1044
        %1060 = vmatpush1.msra.mxu0 %v1043
        %1061 = vmatprep.subr.mxu0 %v1040
        %1062 = vmatpush1.msra.mxu0 %v1039
        %1063 = vmatprep.subr.mxu0 %v1036
        %1064 = vmatpush1.msra.mxu0 %v1035
        %1065 = vmatprep.subr.mxu0 %v1032
        %1066 = vmatpush1.msra.mxu0 %v1031
        %1067 = vmatprep.subr.mxu0 %v1028
        %1068 = vmatpush1.msra.mxu0 %v1027
        %1069 = vmatprep.subr.mxu0 %v1024
        %1070 = vmatpush1.msra.mxu0 %v1023
        %1071 = vmatprep.subr.mxu0 %v1020
        %1072 = vmatpush1.msra.mxu0 %v1019
        %1073 = vmatprep.subr.mxu0 %v1016
        %1074 = vmatpush1.msra.mxu0 %v1015
        %1075 = vmatprep.subr.mxu0 %v1012
        %1076 = vmatpush1.msra.mxu0 %v1011
        %1077 = vmatprep.subr.mxu0 %v1008
        %1078 = vmatpush1.msra.mxu0 %v1007
        %1079 = vmatprep.subr.mxu0 %v1004
        %1080 = vmatpush1.msra.mxu0 %v1003
        %1081 = vmatprep.subr.mxu0 %v1000
        %1082 = vmatpush1.msra.mxu0 %v999
        %1083 = vmatprep.subr.mxu0 %v996
        %1084 = vmatpush1.msra.mxu0 %v995
        %1085 = vmatprep.subr.mxu0 %v992
        %1086 = vmatpush1.msra.mxu0 %v991
        %1087 = vmatprep.subr.mxu0 0.0
        %1088 = vmatpush2.msra.mxu0 0.0
        %1089 = vmatprep.subr.mxu0 0.0
        %1090 = vmatpush2.msra.mxu0 0.0
        %1091 = vmatprep.subr.mxu0 0.0
        %1092 = vmatpush2.msra.mxu0 0.0
        %1093 = vmatprep.subr.mxu0 0.0
        %1094 = vmatpush2.msra.mxu0 0.0
        %1095 = vmatprep.subr.mxu0 0.0
        %1096 = vmatpush2.msra.mxu0 0.0
        %1097 = vmatprep.subr.mxu0 0.0
        %1098 = vmatpush2.msra.mxu0 0.0
        %1099 = vmatprep.subr.mxu0 0.0
        %1100 = vmatpush2.msra.mxu0 0.0
        %1101 = vmatprep.subr.mxu0 0.0
        %1102 = vmatpush2.msra.mxu0 0.0
        %1103 = vmatprep.subr.mxu0 0.0
        %1104 = vmatpush2.msra.mxu0 0.0
        %1105 = vmatprep.subr.mxu0 0.0
        %1106 = vmatpush2.msra.mxu0 0.0
        %1107 = vmatprep.subr.mxu0 0.0
        %1108 = vmatpush2.msra.mxu0 0.0
        %1109 = vmatprep.subr.mxu0 0.0
        %1110 = vmatpush2.msra.mxu0 0.0
        %1111 = vmatprep.subr.mxu0 0.0
        %1112 = vmatpush2.msra.mxu0 0.0
        %1113 = vmatprep.subr.mxu0 0.0
        %1114 = vmatpush2.msra.mxu0 0.0
        %1115 = vmatprep.subr.mxu0 0.0
        %1116 = vmatpush2.msra.mxu0 0.0
        %1117 = vmatprep.subr.mxu0 0.0
        %1118 = vmatpush2.msra.mxu0 0.0
        %1119 = vmatprep.mubr.f32.mxu0 0.0
        %1120 = vmatmul.mubr.f32.gmra.mxu0 %v990
        %v1121 = vpop.f32.mrf.mxu0
        %v1122 = vadd.f32 0.0, %v1121
        %v1123 = vpop.f32.mrf.mxu0
        %v1124 = vadd.f32 0.0, %v1123
        %1125 = vdwg.mxu0
        %1126 = vmatprep.subr.mxu0 %v1054
        %1127 = vmatpush1.msra.mxu0 %v1053
        %1128 = vmatprep.subr.mxu0 %v1050
        %1129 = vmatpush1.msra.mxu0 %v1049
        %1130 = vmatprep.subr.mxu0 %v1046
        %1131 = vmatpush1.msra.mxu0 %v1045
        %1132 = vmatprep.subr.mxu0 %v1042
        %1133 = vmatpush1.msra.mxu0 %v1041
        %1134 = vmatprep.subr.mxu0 %v1038
        %1135 = vmatpush1.msra.mxu0 %v1037
        %1136 = vmatprep.subr.mxu0 %v1034
        %1137 = vmatpush1.msra.mxu0 %v1033
        %1138 = vmatprep.subr.mxu0 %v1030
        %1139 = vmatpush1.msra.mxu0 %v1029
        %1140 = vmatprep.subr.mxu0 %v1026
        %1141 = vmatpush1.msra.mxu0 %v1025
        %1142 = vmatprep.subr.mxu0 %v1022
        %1143 = vmatpush1.msra.mxu0 %v1021
        %1144 = vmatprep.subr.mxu0 %v1018
        %1145 = vmatpush1.msra.mxu0 %v1017
        %1146 = vmatprep.subr.mxu0 %v1014
        %1147 = vmatpush1.msra.mxu0 %v1013
        %1148 = vmatprep.subr.mxu0 %v1010
        %1149 = vmatpush1.msra.mxu0 %v1009
        %1150 = vmatprep.subr.mxu0 %v1006
        %1151 = vmatpush1.msra.mxu0 %v1005
        %1152 = vmatprep.subr.mxu0 %v1002
        %1153 = vmatpush1.msra.mxu0 %v1001
        %1154 = vmatprep.subr.mxu0 %v998
        %1155 = vmatpush1.msra.mxu0 %v997
        %1156 = vmatprep.subr.mxu0 %v994
        %1157 = vmatpush1.msra.mxu0 %v993
        %1158 = vmatprep.subr.mxu0 0.0
        %1159 = vmatpush2.msra.mxu0 0.0
        %1160 = vmatprep.subr.mxu0 0.0
        %1161 = vmatpush2.msra.mxu0 0.0
        %1162 = vmatprep.subr.mxu0 0.0
        %1163 = vmatpush2.msra.mxu0 0.0
        %1164 = vmatprep.subr.mxu0 0.0
        %1165 = vmatpush2.msra.mxu0 0.0
        %1166 = vmatprep.subr.mxu0 0.0
        %1167 = vmatpush2.msra.mxu0 0.0
        %1168 = vmatprep.subr.mxu0 0.0
        %1169 = vmatpush2.msra.mxu0 0.0
        %1170 = vmatprep.subr.mxu0 0.0
        %1171 = vmatpush2.msra.mxu0 0.0
        %1172 = vmatprep.subr.mxu0 0.0
        %1173 = vmatpush2.msra.mxu0 0.0
        %1174 = vmatprep.subr.mxu0 0.0
        %1175 = vmatpush2.msra.mxu0 0.0
        %1176 = vmatprep.subr.mxu0 0.0
        %1177 = vmatpush2.msra.mxu0 0.0
        %1178 = vmatprep.subr.mxu0 0.0
        %1179 = vmatpush2.msra.mxu0 0.0
        %1180 = vmatprep.subr.mxu0 0.0
        %1181 = vmatpush2.msra.mxu0 0.0
        %1182 = vmatprep.subr.mxu0 0.0
        %1183 = vmatpush2.msra.mxu0 0.0
        %1184 = vmatprep.subr.mxu0 0.0
        %1185 = vmatpush2.msra.mxu0 0.0
        %1186 = vmatprep.subr.mxu0 0.0
        %1187 = vmatpush2.msra.mxu0 0.0
        %1188 = vmatprep.subr.mxu0 0.0
        %1189 = vmatpush2.msra.mxu0 0.0
        %1190 = vmatprep.mubr.f32.mxu0 0.0
        %1191 = vmatmul.mubr.f32.gmra.mxu0 %v990
        %v1192 = vpop.f32.mrf.mxu0
        %v1193 = vadd.f32 0.0, %v1192
        %v1194 = vpop.f32.mrf.mxu0
        %v1195 = vadd.f32 0.0, %v1194
        %1196 = vdwg.mxu0
        %v1201 = vcombine.low %v1122, %v1124
        %v1202 = vcombine.low %v1193, %v1195
        %v1204 = vunpack.c.l.s4 1983009808
        %v1205 = vunpack.c.0.s8 %v1204
        %v1206 = vlaneseq
        %v1207 = vshrl.u32 %v1206, 7
        %v1208 = vsub.s32 %v1205, %v1207
        %v1209 = vrot.slane %v1201, %v1208
        %v1211 = vunpack.c.l.s4 1983009808
        %v1212 = vunpack.c.0.s8 %v1211
        %v1213 = vlaneseq
        %v1214 = vshrl.u32 %v1213, 7
        %v1215 = vsub.s32 %v1212, %v1214
        %v1216 = vrot.slane %v1202, %v1215
        %v1217 = vcombine.low %v1209, %v1216
        %v1219 = vadd.f32 %v989, %v1217
        %v1220 = vmul.f32 %v1219, 0.5
        %v1221 = vtanh.pop %v1220
        %v1222 = vmul.f32 %v1221, 0.5
        %v1223 = vadd.f32 %v1222, 0.5
        %v1225 = vrot.slane %v1219, 2
        %v1227 = vmul.f32 %v1225, 0.5
        %v1228 = vtanh.pop %v1227
        %v1229 = vmul.f32 %v1228, 0.5
        %v1230 = vadd.f32 %v1229, 0.5
        %v1231 = vrot.slane %v1219, 4
        %v1233 = vtanh.pop %v1231
        %v1234 = vrot.slane %v1219, 6
        %v1236 = vmul.f32 %v1234, 0.5
        %v1237 = vtanh.pop %v1236
        %v1238 = vmul.f32 %v1237, 0.5
        %v1239 = vadd.f32 %v1238, 0.5
        %v1240 = vld [vmem:[#allocation3] sm:$0x3]
        %v1241 = vmul.f32 %v1230, %v1240
        %v1242 = vmul.f32 %v1223, %v1233
        %v1243 = vadd.f32 %v1241, %v1242
        %v1244 = vtanh.pop %v1243
        %v1245 = vmul.f32 %v1239, %v1244
        %1246 = vst [vmem:[#allocation3] sm:$0x3] %v1243
        %1247 = vst [vmem:[#allocation2] sm:$0x3] %v1245
        %s1248 = scalar_lea.vmem %s195, 6 [#allocation9]
        %1249 = vst [vmem:[%s1248] sm:$0x3] %v1245
        %s1250 = sand.u32 %s91, 1
        %s1251 = scalar_lea.sflag [#allocation6], %s1250
        %s1252 = sand.u32 %s91, 1
        %s1253 = smul.addr %s1252, 8
        %s1254 = scalar_lea.vmem [#allocation9], %s1253
        // Predicated region
        $region41: #{tpu_custom_call.1} parent=27 // pred_check
          %p1255 = pneg %p101
        $region42: #{tpu_custom_call.1} parent=27 // pred_check_branch
          %1257 = sbr.rel (%p1255) target = $region44
        $region43: #{tpu_custom_call.1} parent=27 // pred_region
          %s1258 = smul.u32 4, %s25
          %s1260 = ssub.s32 128, 128
          %1261 = vsyncadd %s1251, %s1260
          %s1262 = sadd.s32 %s24, %s1258
          %s1263 = smul.addr %s1262, 32
          %s1264 = scalar_lea.hbm %s2, %s1263
          %s1265 = sshll.u32 %s1254, 4
          %s1266 = int_to_ptr.vmem [resolvable:$true] %s1265
          %1271 = dma.vmem_to_hbm [thread:$0]  %s1266, 128, %s1264, %s1251, 32, 32, 2
        $region44: #{tpu_custom_call.1} parent=27 // pred_fallthru
          _
      $region28: #{tpu_custom_call.1} parent=5 // pred_fallthru
        _
      %p1272 = scmp.le.s32.totalorder 2, %s15
      // Predicated region
      $region45: #{tpu_custom_call.1} parent=5 // pred_check
        %p1273 = pneg %p1272
      $region46: #{tpu_custom_call.1} parent=5 // pred_check_branch
        %1275 = sbr.rel (%p1273) target = $region48
      $region47: #{tpu_custom_call.1} parent=5 // pred_region
        %s1276 = ssub.s32 %s15, 2
        // Predicated region
        $region49: #{tpu_custom_call.1} parent=47 // pred_check
          %p1277 = pneg %p107
        $region50: #{tpu_custom_call.1} parent=47 // pred_check_branch
          %1279 = sbr.rel (%p1277) target = $region52
        $region51: #{tpu_custom_call.1} parent=47 // pred_region
          %s1280 = sand.u32 %s92, 1
          %s1281 = scalar_lea.sflag [#allocation6], %s1280
          %s1282 = sand.u32 %s92, 1
          %s1283 = smul.addr %s1282, 8
          %s1284 = scalar_lea.vmem [#allocation9], %s1283
          %1285 = dma.done %s1281, 128
        $region52: #{tpu_custom_call.1} parent=47 // pred_fallthru
          _
      $region48: #{tpu_custom_call.1} parent=5 // pred_fallthru
        _
    $region6: #{tpu_custom_call.1} parent=1 // loop_footer
      %s19 = sadd.s32 1, %s15
    $region7: #{tpu_custom_call.1} parent=1 // loop_footer_branch
      %14 = sbr.rel target = $region3
    $region8: #{tpu_custom_call.1} parent=1 // loop_exit
      _
    %1286 = vsyncpa [#allocation5], 1
    %s1287 = scalar_lea.sflag [#allocation5], 1
    %1288 = vsyncpa %s1287, 1
    %1289 = vsyncpa [#allocation8], 1
    %1290 = vsyncpa [#allocation6], 1
    %s1291 = scalar_lea.sflag [#allocation6], 1
    %1292 = vsyncpa %s1291, 1

</llo_original>
